<compile_context>
chip_gen: v7x
topology: tpu7x:2x2x1
jax: 0.10.0
libtpu: 0.0.40
codegen_flags: <defaults>
</compile_context>

<pallas_src>
import functools

import jax
import jax.numpy as jnp
import numpy as np
from jax import lax
from jax.experimental import pallas as pl
from jax.experimental.pallas import tpu as pltpu


def _split_hi_lo(v):
    """f32 -> (bf16 hi, bf16 lo) with hi + lo == v up to ~2^-18 relative."""
    hi = v.astype(jnp.bfloat16)
    lo = (v - hi.astype(jnp.float32)).astype(jnp.bfloat16)
    return hi, lo


# ---------------------------------------------------------------------------
# Kernel
# ---------------------------------------------------------------------------
def _ar_lstm_kernel(x_ref, wpack_ref, lpack_ref, out_ref, c_out_ref, *,
                    input_size, hidden_size, output_size, batch,
                    predict_ahead, n_steps):
    I, H, O, B, P = input_size, hidden_size, output_size, batch, predict_ahead
    f32 = jnp.float32

    # -- preamble: unpack the two packed parameter slabs (static slices) -----
    wp = wpack_ref[...]                        # (I + 2H + 2, 4H)
    w_ih_t = wp[:I]                            # (I, 4H)  gate order (i,f,o,g)
    w_hh_t = wp[I:I + H]                       # (H, 4H)
    w_ar = wp[I + H:I + 2 * H]                 # (H, 4H)  W_lin^T@W_ih^T + W_hh^T
    bias = wp[I + 2 * H:I + 2 * H + 1]         # (1, 4H)  b_ih + b_hh (reordered)
    b_ar = wp[I + 2 * H + 1:I + 2 * H + 2]     # (1, 4H)  b_lin@W_ih^T + bias

    lp = lpack_ref[...]                        # (H + 1, O)
    w_lin_t = lp[:H]                           # (H, O)
    b_lin = lp[H:H + 1]                        # (1, O)

    # Off-path bf16 hi/lo splits of the recurrent weights (done once).
    whh_hi, whh_lo = _split_hi_lo(w_hh_t)
    war_hi, war_lo = _split_hi_lo(w_ar)

    # Hoisted bias broadcasts (JAX does not CSE broadcast_in_dim in loops).
    b_ar_b = jnp.broadcast_to(b_ar, (n_steps * B, 4 * H))
    b_lin_b = jnp.broadcast_to(b_lin, (P * n_steps * B, O))

    def dot3(h, w_hi, w_lo):
        # 3-pass bf16 hi/lo product (HIGH-equivalent, ~1e-5 rel error); about
        # half the MXU passes of f32 HIGHEST on the dependent chain.
        h_hi, h_lo = _split_hi_lo(h)
        d = functools.partial(jnp.dot, preferred_element_type=f32)
        return d(h_hi, w_hi) + d(h_hi, w_lo) + d(h_lo, w_hi)

    def cell_update(gates, c):
        # Gate layout (i, f, o | g): one sigmoid over 3H lanes, one tanh over H.
        sig = jax.nn.sigmoid(gates[:, :3 * H])
        g = jnp.tanh(gates[:, 3 * H:])
        i = sig[:, :H]
        f = sig[:, H:2 * H]
        o = sig[:, 2 * H:3 * H]
        c_new = f * c + i * g
        h_new = o * jnp.tanh(c_new)
        return h_new, c_new

    # -- Phase 0: input->gate contribution for every teacher-forced step -----
    # Single off-path matmul; HIGHEST is cheap here and keeps full accuracy.
    xg = jnp.dot(x_ref[...], w_ih_t, preferred_element_type=f32,
                 precision=lax.Precision.HIGHEST) + bias      # (n_steps*B, 4H)

    # -- Phase 1: teacher-forced chain (serial in t, fully unrolled) ---------
    c = jnp.zeros((B, H), f32)
    h = jnp.zeros((B, H), f32)
    h_snaps = []
    c_snaps = []
    for t in range(n_steps):
        xg_t = xg[t * B:(t + 1) * B, :]
        gates = xg_t if t == 0 else xg_t + dot3(h, whh_hi, whh_lo)  # h==0 at t=0
        h, c = cell_update(gates, c)
        h_snaps.append(h)
        c_snaps.append(c)
    c_out_ref[...] = c                                   # final teacher-forced c_t

    # -- Phase 2: all n_steps autoregressive rollouts batched together -------
    h_a = jnp.concatenate(h_snaps, axis=0)               # (n_steps*B, H)
    c_a = jnp.concatenate(c_snaps, axis=0)
    y_snaps = [h_a]                                      # y_p = linear(snapshot_p)
    for _ in range(P - 1):
        gates = dot3(h_a, war_hi, war_lo) + b_ar_b
        h_a, c_a = cell_update(gates, c_a)
        y_snaps.append(h_a)

    # Deferred output Linear: ONE (P*n_steps*B, H) x (H, O) matmul + one store.
    h_all = jnp.concatenate(y_snaps, axis=0)             # (P*n_steps*B, H)
    out_ref[...] = (jnp.dot(h_all, w_lin_t, preferred_element_type=f32,
                            precision=lax.Precision.HIGHEST) + b_lin_b)
    # TODO(synk): is_decoder=True path (externally supplied c_0) is not wired;
    #             this implements the default zero-initialized c_0.


# ---------------------------------------------------------------------------
# Wrapper
# ---------------------------------------------------------------------------
def autoregressive_lstm_forward(x, params, predict_ahead=5):
    """x: (B, S, I) float32 -> (final_output (B, n_steps, P, O), c_t (1, B, H))."""
    B, S, I = x.shape
    H = params["w_hh"].shape[1]
    O = params["w_lin"].shape[0]
    n_steps = S - predict_ahead + 1
    assert n_steps >= 1 and O == I, "output feeds back into the LSTM input"

    f32 = jnp.float32
    # Only the first n_steps inputs are consumed; flatten time-major to
    # (n_steps*B, I) with row index t*B + b.
    x_flat = jnp.transpose(x[:, :n_steps, :], (1, 0, 2)).reshape(
        n_steps * B, I).astype(f32)

    # Gate reorder: PyTorch (i, f, g, o) -> (i, f, o, g) so the kernel applies
    # sigmoid to one contiguous [:3H] slice and tanh to [3H:].
    perm = np.concatenate([np.arange(0, 2 * H),
                           np.arange(3 * H, 4 * H),
                           np.arange(2 * H, 3 * H)])
    w_ih_t = params["w_ih"].T.astype(f32)[:, perm]                 # (I, 4H)
    w_hh_t = params["w_hh"].T.astype(f32)[:, perm]                 # (H, 4H)
    bias = (params["b_ih"] + params["b_hh"]).astype(f32).reshape(
        1, 4 * H)[:, perm]                                         # (1, 4H)
    w_lin_t = params["w_lin"].T.astype(f32)                        # (H, O)
    b_lin = params["b_lin"].astype(f32).reshape(1, O)              # (1, O)

    # Fold the output Linear into the autoregressive recurrent weight:
    #   gates = (h @ w_lin_t + b_lin) @ w_ih_t + h @ w_hh_t + bias
    #         =  h @ (w_lin_t @ w_ih_t + w_hh_t) + (b_lin @ w_ih_t + bias)
    w_ar = jnp.dot(w_lin_t, w_ih_t, precision=lax.Precision.HIGHEST) + w_hh_t
    b_ar = jnp.dot(b_lin, w_ih_t, precision=lax.Precision.HIGHEST) + bias

    # Pack the eight tiny parameter tensors into two slabs -> 3 input DMAs.
    wpack = jnp.concatenate([w_ih_t, w_hh_t, w_ar, bias, b_ar],
                            axis=0)                                # (I+2H+2, 4H)
    lpack = jnp.concatenate([w_lin_t, b_lin], axis=0)              # (H+1, O)

    kernel = functools.partial(
        _ar_lstm_kernel, input_size=I, hidden_size=H, output_size=O,
        batch=B, predict_ahead=predict_ahead, n_steps=n_steps)

    vmem = pl.BlockSpec(memory_space=pltpu.MemorySpace.VMEM)
    out_flat, c_last = pl.pallas_call(
        kernel,
        out_shape=(
            jax.ShapeDtypeStruct((predict_ahead * n_steps * B, O), f32),
            jax.ShapeDtypeStruct((B, H), f32),
        ),
        in_specs=[vmem, vmem, vmem],
        out_specs=(vmem, vmem),
        # TODO(synk): on v7x, once batch grows, add a leading grid axis over
        #             batch with dimension_semantics=("parallel",) so both
        #             TensorCores are used; at B=2 a single grid point is best.
    )(x_flat, wpack, lpack)

    # (P*n_steps*B, O) -> (P, n_steps, B, O) -> (B, n_steps, P, O)
    final_output = jnp.transpose(
        out_flat.reshape(predict_ahead, n_steps, B, O), (2, 1, 0, 3))
    return final_output, c_last.reshape(1, B, H)


# ---------------------------------------------------------------------------
# Deterministic parameter init (PyTorch-style U(-1/sqrt(H), 1/sqrt(H)))
# ---------------------------------------------------------------------------
def init_params(key, input_size, hidden_size, output_size):
    k = 1.0 / np.sqrt(hidden_size)
    ks = jax.random.split(key, 6)
    H, I, O = hidden_size, input_size, output_size
    return {
        "w_ih": jax.random.uniform(ks[0], (4 * H, I), jnp.float32, -k, k),
        "w_hh": jax.random.uniform(ks[1], (4 * H, H), jnp.float32, -k, k),
        "b_ih": jax.random.uniform(ks[2], (4 * H,), jnp.float32, -k, k),
        "b_hh": jax.random.uniform(ks[3], (4 * H,), jnp.float32, -k, k),
        "w_lin": jax.random.uniform(ks[4], (O, H), jnp.float32, -k, k),
        "b_lin": jax.random.uniform(ks[5], (O,), jnp.float32, -k, k),
    }


# ---------------------------------------------------------------------------
# Pure-numpy reference (mirrors the PyTorch forward exactly, original gate order)
# ---------------------------------------------------------------------------
def reference_numpy(x, params, predict_ahead):
    x = np.asarray(x, np.float64)
    w_ih = np.asarray(params["w_ih"], np.float64)
    w_hh = np.asarray(params["w_hh"], np.float64)
    b_ih = np.asarray(params["b_ih"], np.float64)
    b_hh = np.asarray(params["b_hh"], np.float64)
    w_lin = np.asarray(params["w_lin"], np.float64)
    b_lin = np.asarray(params["b_lin"], np.float64)
    B, S, _ = x.shape
    H = w_hh.shape[1]

    def sig(z):
        return 1.0 / (1.0 + np.exp(-z))

    def cell(xt, h, c):
        g = xt @ w_ih.T + b_ih + h @ w_hh.T + b_hh
        i, f = sig(g[:, :H]), sig(g[:, H:2 * H])
        gg, o = np.tanh(g[:, 2 * H:3 * H]), sig(g[:, 3 * H:])
        c2 = f * c + i * gg
        return o * np.tanh(c2), c2

    h = np.zeros((B, H))
    c = np.zeros((B, H))
    outs = []
    for t in range(S - predict_ahead + 1):
        h, c = cell(x[:, t, :], h, c)
        ha, ca = h, c
        y = h @ w_lin.T + b_lin
        step_out = [y]
        for _ in range(predict_ahead - 1):
            ha, ca = cell(y, ha, ca)
            y = ha @ w_lin.T + b_lin
            step_out.append(y)
        outs.append(np.stack(step_out, axis=1))          # (B, P, O)
    final = np.stack(outs, axis=1)                       # (B, n_steps, P, O)
    return final.astype(np.float32), c[None].astype(np.float32)


# ---------------------------------------------------------------------------
if __name__ == "__main__":
    input_size = 4
    hidden_size = 10
    output_size = 4
    predict_ahead = 5
    batch, seq_len = 2, 8

    root = jax.random.PRNGKey(0)
    pkey, xkey = jax.random.split(root)
    params = init_params(pkey, input_size, hidden_size, output_size)
    x = jax.random.normal(xkey, (batch, seq_len, input_size), jnp.float32)

    final_output, c_t = autoregressive_lstm_forward(x, params, predict_ahead)
    final_output = jax.block_until_ready(final_output)
    c_t = jax.block_until_ready(c_t)

    ref_out, ref_c = reference_numpy(x, params, predict_ahead)
    assert final_output.shape == (batch, seq_len - predict_ahead + 1,
                                  predict_ahead, output_size)
    assert c_t.shape == (1, batch, hidden_size)
    np.testing.assert_allclose(np.asarray(final_output), ref_out,
                               rtol=1e-4, atol=1e-4)
    np.testing.assert_allclose(np.asarray(c_t), ref_c, rtol=1e-4, atol=1e-4)

    print("KERNEL_OK")
</pallas_src>

<mosaic_0001>
module attributes {stable_mosaic.version = 11 : i64} {
  func.func @_ar_lstm_kernel(%arg0: memref<8x4xf32, #tpu.memory_space<vmem>>, %arg1: memref<26x40xf32, #tpu.memory_space<vmem>>, %arg2: memref<11x4xf32, #tpu.memory_space<vmem>>, %arg3: memref<40x4xf32, #tpu.memory_space<vmem>>, %arg4: memref<2x10xf32, #tpu.memory_space<vmem>>) attributes {dimension_semantics = [], scalar_prefetch = 0 : i64, scratch_operands = 0 : i64, tpu.core_type = #tpu.core_type<tc>} {
    %c0 = arith.constant 0 : index
    %c0_0 = arith.constant 0 : index
    %0 = vector.load %arg1[%c0, %c0_0] : memref<26x40xf32, #tpu.memory_space<vmem>>, vector<26x40xf32>
    %1 = vector.extract_strided_slice %0 {offsets = [0, 0], sizes = [4, 40], strides = [1, 1]} : vector<26x40xf32> to vector<4x40xf32>
    %2 = vector.extract_strided_slice %0 {offsets = [4, 0], sizes = [10, 40], strides = [1, 1]} : vector<26x40xf32> to vector<10x40xf32>
    %3 = vector.extract_strided_slice %0 {offsets = [14, 0], sizes = [10, 40], strides = [1, 1]} : vector<26x40xf32> to vector<10x40xf32>
    %4 = vector.extract_strided_slice %0 {offsets = [24, 0], sizes = [1, 40], strides = [1, 1]} : vector<26x40xf32> to vector<1x40xf32>
    %5 = vector.extract_strided_slice %0 {offsets = [25, 0], sizes = [1, 40], strides = [1, 1]} : vector<26x40xf32> to vector<1x40xf32>
    %c0_1 = arith.constant 0 : index
    %c0_2 = arith.constant 0 : index
    %6 = vector.load %arg2[%c0_1, %c0_2] : memref<11x4xf32, #tpu.memory_space<vmem>>, vector<11x4xf32>
    %7 = vector.extract_strided_slice %6 {offsets = [0, 0], sizes = [10, 4], strides = [1, 1]} : vector<11x4xf32> to vector<10x4xf32>
    %8 = vector.extract_strided_slice %6 {offsets = [10, 0], sizes = [1, 4], strides = [1, 1]} : vector<11x4xf32> to vector<1x4xf32>
    %9 = arith.truncf %2 : vector<10x40xf32> to vector<10x40xbf16>
    %10 = arith.extf %9 : vector<10x40xbf16> to vector<10x40xf32>
    %11 = arith.subf %2, %10 : vector<10x40xf32>
    %12 = arith.truncf %11 : vector<10x40xf32> to vector<10x40xbf16>
    %13 = arith.truncf %3 : vector<10x40xf32> to vector<10x40xbf16>
    %14 = arith.extf %13 : vector<10x40xbf16> to vector<10x40xf32>
    %15 = arith.subf %3, %14 : vector<10x40xf32>
    %16 = arith.truncf %15 : vector<10x40xf32> to vector<10x40xbf16>
    %17 = vector.shape_cast %5 : vector<1x40xf32> to vector<1x40xf32>
    %18 = vector.broadcast %17 : vector<1x40xf32> to vector<8x40xf32>
    %19 = vector.shape_cast %8 : vector<1x4xf32> to vector<1x4xf32>
    %20 = vector.broadcast %19 : vector<1x4xf32> to vector<40x4xf32>
    %c0_3 = arith.constant 0 : index
    %c0_4 = arith.constant 0 : index
    %21 = vector.load %arg0[%c0_3, %c0_4] : memref<8x4xf32, #tpu.memory_space<vmem>>, vector<8x4xf32>
    %cst = arith.constant dense<0.000000e+00> : vector<8x40xf32>
    %22 = tpu.matmul %21, %1, %cst {dimension_numbers = #tpu.dot_dimension_numbers<[1], [0], [0], [1], [0, 0, 1, 1], [], []>, precision = #tpu.contract_precision<fp32>} : vector<8x4xf32>, vector<4x40xf32>, vector<8x40xf32> -> vector<8x40xf32>
    %23 = vector.broadcast %4 : vector<1x40xf32> to vector<8x40xf32>
    %24 = arith.addf %22, %23 : vector<8x40xf32>
    %cst_5 = arith.constant 0.000000e+00 : f32
    %25 = vector.broadcast %cst_5 : f32 to vector<2x10xf32>
    %26 = vector.extract_strided_slice %24 {offsets = [0, 0], sizes = [2, 40], strides = [1, 1]} : vector<8x40xf32> to vector<2x40xf32>
    %27 = vector.extract_strided_slice %26 {offsets = [0, 0], sizes = [2, 30], strides = [1, 1]} : vector<2x40xf32> to vector<2x30xf32>
    %28 = arith.negf %27 : vector<2x30xf32>
    %29 = math.exp %28 : vector<2x30xf32>
    %cst_6 = arith.constant 1.000000e+00 : f32
    %30 = vector.broadcast %cst_6 : f32 to vector<2x30xf32>
    %31 = arith.addf %30, %29 : vector<2x30xf32>
    %32 = arith.divf %30, %31 : vector<2x30xf32>
    %33 = vector.extract_strided_slice %26 {offsets = [0, 30], sizes = [2, 10], strides = [1, 1]} : vector<2x40xf32> to vector<2x10xf32>
    %34 = math.tanh %33 : vector<2x10xf32>
    %35 = vector.extract_strided_slice %32 {offsets = [0, 0], sizes = [2, 10], strides = [1, 1]} : vector<2x30xf32> to vector<2x10xf32>
    %36 = vector.extract_strided_slice %32 {offsets = [0, 10], sizes = [2, 10], strides = [1, 1]} : vector<2x30xf32> to vector<2x10xf32>
    %37 = vector.extract_strided_slice %32 {offsets = [0, 20], sizes = [2, 10], strides = [1, 1]} : vector<2x30xf32> to vector<2x10xf32>
    %38 = arith.mulf %36, %25 : vector<2x10xf32>
    %39 = arith.mulf %35, %34 : vector<2x10xf32>
    %40 = arith.addf %38, %39 : vector<2x10xf32>
    %41 = math.tanh %40 : vector<2x10xf32>
    %42 = arith.mulf %37, %41 : vector<2x10xf32>
    %43 = vector.extract_strided_slice %24 {offsets = [2, 0], sizes = [2, 40], strides = [1, 1]} : vector<8x40xf32> to vector<2x40xf32>
    %44 = arith.truncf %42 : vector<2x10xf32> to vector<2x10xbf16>
    %45 = arith.extf %44 : vector<2x10xbf16> to vector<2x10xf32>
    %46 = arith.subf %42, %45 : vector<2x10xf32>
    %47 = arith.truncf %46 : vector<2x10xf32> to vector<2x10xbf16>
    %cst_7 = arith.constant dense<0.000000e+00> : vector<2x40xf32>
    %48 = tpu.matmul %44, %9, %cst_7 {dimension_numbers = #tpu.dot_dimension_numbers<[1], [0], [0], [1], [0, 0, 1, 1], [], []>} : vector<2x10xbf16>, vector<10x40xbf16>, vector<2x40xf32> -> vector<2x40xf32>
    %cst_8 = arith.constant dense<0.000000e+00> : vector<2x40xf32>
    %49 = tpu.matmul %44, %12, %cst_8 {dimension_numbers = #tpu.dot_dimension_numbers<[1], [0], [0], [1], [0, 0, 1, 1], [], []>} : vector<2x10xbf16>, vector<10x40xbf16>, vector<2x40xf32> -> vector<2x40xf32>
    %50 = arith.addf %48, %49 : vector<2x40xf32>
    %cst_9 = arith.constant dense<0.000000e+00> : vector<2x40xf32>
    %51 = tpu.matmul %47, %9, %cst_9 {dimension_numbers = #tpu.dot_dimension_numbers<[1], [0], [0], [1], [0, 0, 1, 1], [], []>} : vector<2x10xbf16>, vector<10x40xbf16>, vector<2x40xf32> -> vector<2x40xf32>
    %52 = arith.addf %50, %51 : vector<2x40xf32>
    %53 = arith.addf %43, %52 : vector<2x40xf32>
    %54 = vector.extract_strided_slice %53 {offsets = [0, 0], sizes = [2, 30], strides = [1, 1]} : vector<2x40xf32> to vector<2x30xf32>
    %55 = arith.negf %54 : vector<2x30xf32>
    %56 = math.exp %55 : vector<2x30xf32>
    %cst_10 = arith.constant 1.000000e+00 : f32
    %57 = vector.broadcast %cst_10 : f32 to vector<2x30xf32>
    %58 = arith.addf %57, %56 : vector<2x30xf32>
    %59 = arith.divf %57, %58 : vector<2x30xf32>
    %60 = vector.extract_strided_slice %53 {offsets = [0, 30], sizes = [2, 10], strides = [1, 1]} : vector<2x40xf32> to vector<2x10xf32>
    %61 = math.tanh %60 : vector<2x10xf32>
    %62 = vector.extract_strided_slice %59 {offsets = [0, 0], sizes = [2, 10], strides = [1, 1]} : vector<2x30xf32> to vector<2x10xf32>
    %63 = vector.extract_strided_slice %59 {offsets = [0, 10], sizes = [2, 10], strides = [1, 1]} : vector<2x30xf32> to vector<2x10xf32>
    %64 = vector.extract_strided_slice %59 {offsets = [0, 20], sizes = [2, 10], strides = [1, 1]} : vector<2x30xf32> to vector<2x10xf32>
    %65 = arith.mulf %63, %40 : vector<2x10xf32>
    %66 = arith.mulf %62, %61 : vector<2x10xf32>
    %67 = arith.addf %65, %66 : vector<2x10xf32>
    %68 = math.tanh %67 : vector<2x10xf32>
    %69 = arith.mulf %64, %68 : vector<2x10xf32>
    %70 = vector.extract_strided_slice %24 {offsets = [4, 0], sizes = [2, 40], strides = [1, 1]} : vector<8x40xf32> to vector<2x40xf32>
    %71 = arith.truncf %69 : vector<2x10xf32> to vector<2x10xbf16>
    %72 = arith.extf %71 : vector<2x10xbf16> to vector<2x10xf32>
    %73 = arith.subf %69, %72 : vector<2x10xf32>
    %74 = arith.truncf %73 : vector<2x10xf32> to vector<2x10xbf16>
    %cst_11 = arith.constant dense<0.000000e+00> : vector<2x40xf32>
    %75 = tpu.matmul %71, %9, %cst_11 {dimension_numbers = #tpu.dot_dimension_numbers<[1], [0], [0], [1], [0, 0, 1, 1], [], []>} : vector<2x10xbf16>, vector<10x40xbf16>, vector<2x40xf32> -> vector<2x40xf32>
    %cst_12 = arith.constant dense<0.000000e+00> : vector<2x40xf32>
    %76 = tpu.matmul %71, %12, %cst_12 {dimension_numbers = #tpu.dot_dimension_numbers<[1], [0], [0], [1], [0, 0, 1, 1], [], []>} : vector<2x10xbf16>, vector<10x40xbf16>, vector<2x40xf32> -> vector<2x40xf32>
    %77 = arith.addf %75, %76 : vector<2x40xf32>
    %cst_13 = arith.constant dense<0.000000e+00> : vector<2x40xf32>
    %78 = tpu.matmul %74, %9, %cst_13 {dimension_numbers = #tpu.dot_dimension_numbers<[1], [0], [0], [1], [0, 0, 1, 1], [], []>} : vector<2x10xbf16>, vector<10x40xbf16>, vector<2x40xf32> -> vector<2x40xf32>
    %79 = arith.addf %77, %78 : vector<2x40xf32>
    %80 = arith.addf %70, %79 : vector<2x40xf32>
    %81 = vector.extract_strided_slice %80 {offsets = [0, 0], sizes = [2, 30], strides = [1, 1]} : vector<2x40xf32> to vector<2x30xf32>
    %82 = arith.negf %81 : vector<2x30xf32>
    %83 = math.exp %82 : vector<2x30xf32>
    %cst_14 = arith.constant 1.000000e+00 : f32
    %84 = vector.broadcast %cst_14 : f32 to vector<2x30xf32>
    %85 = arith.addf %84, %83 : vector<2x30xf32>
    %86 = arith.divf %84, %85 : vector<2x30xf32>
    %87 = vector.extract_strided_slice %80 {offsets = [0, 30], sizes = [2, 10], strides = [1, 1]} : vector<2x40xf32> to vector<2x10xf32>
    %88 = math.tanh %87 : vector<2x10xf32>
    %89 = vector.extract_strided_slice %86 {offsets = [0, 0], sizes = [2, 10], strides = [1, 1]} : vector<2x30xf32> to vector<2x10xf32>
    %90 = vector.extract_strided_slice %86 {offsets = [0, 10], sizes = [2, 10], strides = [1, 1]} : vector<2x30xf32> to vector<2x10xf32>
    %91 = vector.extract_strided_slice %86 {offsets = [0, 20], sizes = [2, 10], strides = [1, 1]} : vector<2x30xf32> to vector<2x10xf32>
    %92 = arith.mulf %90, %67 : vector<2x10xf32>
    %93 = arith.mulf %89, %88 : vector<2x10xf32>
    %94 = arith.addf %92, %93 : vector<2x10xf32>
    %95 = math.tanh %94 : vector<2x10xf32>
    %96 = arith.mulf %91, %95 : vector<2x10xf32>
    %97 = vector.extract_strided_slice %24 {offsets = [6, 0], sizes = [2, 40], strides = [1, 1]} : vector<8x40xf32> to vector<2x40xf32>
    %98 = arith.truncf %96 : vector<2x10xf32> to vector<2x10xbf16>
    %99 = arith.extf %98 : vector<2x10xbf16> to vector<2x10xf32>
    %100 = arith.subf %96, %99 : vector<2x10xf32>
    %101 = arith.truncf %100 : vector<2x10xf32> to vector<2x10xbf16>
    %cst_15 = arith.constant dense<0.000000e+00> : vector<2x40xf32>
    %102 = tpu.matmul %98, %9, %cst_15 {dimension_numbers = #tpu.dot_dimension_numbers<[1], [0], [0], [1], [0, 0, 1, 1], [], []>} : vector<2x10xbf16>, vector<10x40xbf16>, vector<2x40xf32> -> vector<2x40xf32>
    %cst_16 = arith.constant dense<0.000000e+00> : vector<2x40xf32>
    %103 = tpu.matmul %98, %12, %cst_16 {dimension_numbers = #tpu.dot_dimension_numbers<[1], [0], [0], [1], [0, 0, 1, 1], [], []>} : vector<2x10xbf16>, vector<10x40xbf16>, vector<2x40xf32> -> vector<2x40xf32>
    %104 = arith.addf %102, %103 : vector<2x40xf32>
    %cst_17 = arith.constant dense<0.000000e+00> : vector<2x40xf32>
    %105 = tpu.matmul %101, %9, %cst_17 {dimension_numbers = #tpu.dot_dimension_numbers<[1], [0], [0], [1], [0, 0, 1, 1], [], []>} : vector<2x10xbf16>, vector<10x40xbf16>, vector<2x40xf32> -> vector<2x40xf32>
    %106 = arith.addf %104, %105 : vector<2x40xf32>
    %107 = arith.addf %97, %106 : vector<2x40xf32>
    %108 = vector.extract_strided_slice %107 {offsets = [0, 0], sizes = [2, 30], strides = [1, 1]} : vector<2x40xf32> to vector<2x30xf32>
    %109 = arith.negf %108 : vector<2x30xf32>
    %110 = math.exp %109 : vector<2x30xf32>
    %cst_18 = arith.constant 1.000000e+00 : f32
    %111 = vector.broadcast %cst_18 : f32 to vector<2x30xf32>
    %112 = arith.addf %111, %110 : vector<2x30xf32>
    %113 = arith.divf %111, %112 : vector<2x30xf32>
    %114 = vector.extract_strided_slice %107 {offsets = [0, 30], sizes = [2, 10], strides = [1, 1]} : vector<2x40xf32> to vector<2x10xf32>
    %115 = math.tanh %114 : vector<2x10xf32>
    %116 = vector.extract_strided_slice %113 {offsets = [0, 0], sizes = [2, 10], strides = [1, 1]} : vector<2x30xf32> to vector<2x10xf32>
    %117 = vector.extract_strided_slice %113 {offsets = [0, 10], sizes = [2, 10], strides = [1, 1]} : vector<2x30xf32> to vector<2x10xf32>
    %118 = vector.extract_strided_slice %113 {offsets = [0, 20], sizes = [2, 10], strides = [1, 1]} : vector<2x30xf32> to vector<2x10xf32>
    %119 = arith.mulf %117, %94 : vector<2x10xf32>
    %120 = arith.mulf %116, %115 : vector<2x10xf32>
    %121 = arith.addf %119, %120 : vector<2x10xf32>
    %122 = math.tanh %121 : vector<2x10xf32>
    %123 = arith.mulf %118, %122 : vector<2x10xf32>
    %c0_19 = arith.constant 0 : index
    %c0_20 = arith.constant 0 : index
    %124 = vector.load %arg4[%c0_19, %c0_20] : memref<2x10xf32, #tpu.memory_space<vmem>>, vector<2x10xf32>
    tpu.vector_store %arg4[%c0_19, %c0_20], %121 {strides = array<i32>} : memref<2x10xf32, #tpu.memory_space<vmem>>, vector<2x10xf32>,
    %125 = tpu.concatenate %42, %69, %96, %123 in 0 : vector<2x10xf32>, vector<2x10xf32>, vector<2x10xf32>, vector<2x10xf32> -> vector<8x10xf32>
    %126 = tpu.concatenate %40, %67, %94, %121 in 0 : vector<2x10xf32>, vector<2x10xf32>, vector<2x10xf32>, vector<2x10xf32> -> vector<8x10xf32>
    %127 = arith.truncf %125 : vector<8x10xf32> to vector<8x10xbf16>
    %128 = arith.extf %127 : vector<8x10xbf16> to vector<8x10xf32>
    %129 = arith.subf %125, %128 : vector<8x10xf32>
    %130 = arith.truncf %129 : vector<8x10xf32> to vector<8x10xbf16>
    %cst_21 = arith.constant dense<0.000000e+00> : vector<8x40xf32>
    %131 = tpu.matmul %127, %13, %cst_21 {dimension_numbers = #tpu.dot_dimension_numbers<[1], [0], [0], [1], [0, 0, 1, 1], [], []>} : vector<8x10xbf16>, vector<10x40xbf16>, vector<8x40xf32> -> vector<8x40xf32>
    %cst_22 = arith.constant dense<0.000000e+00> : vector<8x40xf32>
    %132 = tpu.matmul %127, %16, %cst_22 {dimension_numbers = #tpu.dot_dimension_numbers<[1], [0], [0], [1], [0, 0, 1, 1], [], []>} : vector<8x10xbf16>, vector<10x40xbf16>, vector<8x40xf32> -> vector<8x40xf32>
    %133 = arith.addf %131, %132 : vector<8x40xf32>
    %cst_23 = arith.constant dense<0.000000e+00> : vector<8x40xf32>
    %134 = tpu.matmul %130, %13, %cst_23 {dimension_numbers = #tpu.dot_dimension_numbers<[1], [0], [0], [1], [0, 0, 1, 1], [], []>} : vector<8x10xbf16>, vector<10x40xbf16>, vector<8x40xf32> -> vector<8x40xf32>
    %135 = arith.addf %133, %134 : vector<8x40xf32>
    %136 = arith.addf %135, %18 : vector<8x40xf32>
    %137 = vector.extract_strided_slice %136 {offsets = [0, 0], sizes = [8, 30], strides = [1, 1]} : vector<8x40xf32> to vector<8x30xf32>
    %138 = arith.negf %137 : vector<8x30xf32>
    %139 = math.exp %138 : vector<8x30xf32>
    %cst_24 = arith.constant 1.000000e+00 : f32
    %140 = vector.broadcast %cst_24 : f32 to vector<8x30xf32>
    %141 = arith.addf %140, %139 : vector<8x30xf32>
    %142 = arith.divf %140, %141 : vector<8x30xf32>
    %143 = vector.extract_strided_slice %136 {offsets = [0, 30], sizes = [8, 10], strides = [1, 1]} : vector<8x40xf32> to vector<8x10xf32>
    %144 = math.tanh %143 : vector<8x10xf32>
    %145 = vector.extract_strided_slice %142 {offsets = [0, 0], sizes = [8, 10], strides = [1, 1]} : vector<8x30xf32> to vector<8x10xf32>
    %146 = vector.extract_strided_slice %142 {offsets = [0, 10], sizes = [8, 10], strides = [1, 1]} : vector<8x30xf32> to vector<8x10xf32>
    %147 = vector.extract_strided_slice %142 {offsets = [0, 20], sizes = [8, 10], strides = [1, 1]} : vector<8x30xf32> to vector<8x10xf32>
    %148 = arith.mulf %146, %126 : vector<8x10xf32>
    %149 = arith.mulf %145, %144 : vector<8x10xf32>
    %150 = arith.addf %148, %149 : vector<8x10xf32>
    %151 = math.tanh %150 : vector<8x10xf32>
    %152 = arith.mulf %147, %151 : vector<8x10xf32>
    %153 = arith.truncf %152 : vector<8x10xf32> to vector<8x10xbf16>
    %154 = arith.extf %153 : vector<8x10xbf16> to vector<8x10xf32>
    %155 = arith.subf %152, %154 : vector<8x10xf32>
    %156 = arith.truncf %155 : vector<8x10xf32> to vector<8x10xbf16>
    %cst_25 = arith.constant dense<0.000000e+00> : vector<8x40xf32>
    %157 = tpu.matmul %153, %13, %cst_25 {dimension_numbers = #tpu.dot_dimension_numbers<[1], [0], [0], [1], [0, 0, 1, 1], [], []>} : vector<8x10xbf16>, vector<10x40xbf16>, vector<8x40xf32> -> vector<8x40xf32>
    %cst_26 = arith.constant dense<0.000000e+00> : vector<8x40xf32>
    %158 = tpu.matmul %153, %16, %cst_26 {dimension_numbers = #tpu.dot_dimension_numbers<[1], [0], [0], [1], [0, 0, 1, 1], [], []>} : vector<8x10xbf16>, vector<10x40xbf16>, vector<8x40xf32> -> vector<8x40xf32>
    %159 = arith.addf %157, %158 : vector<8x40xf32>
    %cst_27 = arith.constant dense<0.000000e+00> : vector<8x40xf32>
    %160 = tpu.matmul %156, %13, %cst_27 {dimension_numbers = #tpu.dot_dimension_numbers<[1], [0], [0], [1], [0, 0, 1, 1], [], []>} : vector<8x10xbf16>, vector<10x40xbf16>, vector<8x40xf32> -> vector<8x40xf32>
    %161 = arith.addf %159, %160 : vector<8x40xf32>
    %162 = arith.addf %161, %18 : vector<8x40xf32>
    %163 = vector.extract_strided_slice %162 {offsets = [0, 0], sizes = [8, 30], strides = [1, 1]} : vector<8x40xf32> to vector<8x30xf32>
    %164 = arith.negf %163 : vector<8x30xf32>
    %165 = math.exp %164 : vector<8x30xf32>
    %cst_28 = arith.constant 1.000000e+00 : f32
    %166 = vector.broadcast %cst_28 : f32 to vector<8x30xf32>
    %167 = arith.addf %166, %165 : vector<8x30xf32>
    %168 = arith.divf %166, %167 : vector<8x30xf32>
    %169 = vector.extract_strided_slice %162 {offsets = [0, 30], sizes = [8, 10], strides = [1, 1]} : vector<8x40xf32> to vector<8x10xf32>
    %170 = math.tanh %169 : vector<8x10xf32>
    %171 = vector.extract_strided_slice %168 {offsets = [0, 0], sizes = [8, 10], strides = [1, 1]} : vector<8x30xf32> to vector<8x10xf32>
    %172 = vector.extract_strided_slice %168 {offsets = [0, 10], sizes = [8, 10], strides = [1, 1]} : vector<8x30xf32> to vector<8x10xf32>
    %173 = vector.extract_strided_slice %168 {offsets = [0, 20], sizes = [8, 10], strides = [1, 1]} : vector<8x30xf32> to vector<8x10xf32>
    %174 = arith.mulf %172, %150 : vector<8x10xf32>
    %175 = arith.mulf %171, %170 : vector<8x10xf32>
    %176 = arith.addf %174, %175 : vector<8x10xf32>
    %177 = math.tanh %176 : vector<8x10xf32>
    %178 = arith.mulf %173, %177 : vector<8x10xf32>
    %179 = arith.truncf %178 : vector<8x10xf32> to vector<8x10xbf16>
    %180 = arith.extf %179 : vector<8x10xbf16> to vector<8x10xf32>
    %181 = arith.subf %178, %180 : vector<8x10xf32>
    %182 = arith.truncf %181 : vector<8x10xf32> to vector<8x10xbf16>
    %cst_29 = arith.constant dense<0.000000e+00> : vector<8x40xf32>
    %183 = tpu.matmul %179, %13, %cst_29 {dimension_numbers = #tpu.dot_dimension_numbers<[1], [0], [0], [1], [0, 0, 1, 1], [], []>} : vector<8x10xbf16>, vector<10x40xbf16>, vector<8x40xf32> -> vector<8x40xf32>
    %cst_30 = arith.constant dense<0.000000e+00> : vector<8x40xf32>
    %184 = tpu.matmul %179, %16, %cst_30 {dimension_numbers = #tpu.dot_dimension_numbers<[1], [0], [0], [1], [0, 0, 1, 1], [], []>} : vector<8x10xbf16>, vector<10x40xbf16>, vector<8x40xf32> -> vector<8x40xf32>
    %185 = arith.addf %183, %184 : vector<8x40xf32>
    %cst_31 = arith.constant dense<0.000000e+00> : vector<8x40xf32>
    %186 = tpu.matmul %182, %13, %cst_31 {dimension_numbers = #tpu.dot_dimension_numbers<[1], [0], [0], [1], [0, 0, 1, 1], [], []>} : vector<8x10xbf16>, vector<10x40xbf16>, vector<8x40xf32> -> vector<8x40xf32>
    %187 = arith.addf %185, %186 : vector<8x40xf32>
    %188 = arith.addf %187, %18 : vector<8x40xf32>
    %189 = vector.extract_strided_slice %188 {offsets = [0, 0], sizes = [8, 30], strides = [1, 1]} : vector<8x40xf32> to vector<8x30xf32>
    %190 = arith.negf %189 : vector<8x30xf32>
    %191 = math.exp %190 : vector<8x30xf32>
    %cst_32 = arith.constant 1.000000e+00 : f32
    %192 = vector.broadcast %cst_32 : f32 to vector<8x30xf32>
    %193 = arith.addf %192, %191 : vector<8x30xf32>
    %194 = arith.divf %192, %193 : vector<8x30xf32>
    %195 = vector.extract_strided_slice %188 {offsets = [0, 30], sizes = [8, 10], strides = [1, 1]} : vector<8x40xf32> to vector<8x10xf32>
    %196 = math.tanh %195 : vector<8x10xf32>
    %197 = vector.extract_strided_slice %194 {offsets = [0, 0], sizes = [8, 10], strides = [1, 1]} : vector<8x30xf32> to vector<8x10xf32>
    %198 = vector.extract_strided_slice %194 {offsets = [0, 10], sizes = [8, 10], strides = [1, 1]} : vector<8x30xf32> to vector<8x10xf32>
    %199 = vector.extract_strided_slice %194 {offsets = [0, 20], sizes = [8, 10], strides = [1, 1]} : vector<8x30xf32> to vector<8x10xf32>
    %200 = arith.mulf %198, %176 : vector<8x10xf32>
    %201 = arith.mulf %197, %196 : vector<8x10xf32>
    %202 = arith.addf %200, %201 : vector<8x10xf32>
    %203 = math.tanh %202 : vector<8x10xf32>
    %204 = arith.mulf %199, %203 : vector<8x10xf32>
    %205 = arith.truncf %204 : vector<8x10xf32> to vector<8x10xbf16>
    %206 = arith.extf %205 : vector<8x10xbf16> to vector<8x10xf32>
    %207 = arith.subf %204, %206 : vector<8x10xf32>
    %208 = arith.truncf %207 : vector<8x10xf32> to vector<8x10xbf16>
    %cst_33 = arith.constant dense<0.000000e+00> : vector<8x40xf32>
    %209 = tpu.matmul %205, %13, %cst_33 {dimension_numbers = #tpu.dot_dimension_numbers<[1], [0], [0], [1], [0, 0, 1, 1], [], []>} : vector<8x10xbf16>, vector<10x40xbf16>, vector<8x40xf32> -> vector<8x40xf32>
    %cst_34 = arith.constant dense<0.000000e+00> : vector<8x40xf32>
    %210 = tpu.matmul %205, %16, %cst_34 {dimension_numbers = #tpu.dot_dimension_numbers<[1], [0], [0], [1], [0, 0, 1, 1], [], []>} : vector<8x10xbf16>, vector<10x40xbf16>, vector<8x40xf32> -> vector<8x40xf32>
    %211 = arith.addf %209, %210 : vector<8x40xf32>
    %cst_35 = arith.constant dense<0.000000e+00> : vector<8x40xf32>
    %212 = tpu.matmul %208, %13, %cst_35 {dimension_numbers = #tpu.dot_dimension_numbers<[1], [0], [0], [1], [0, 0, 1, 1], [], []>} : vector<8x10xbf16>, vector<10x40xbf16>, vector<8x40xf32> -> vector<8x40xf32>
    %213 = arith.addf %211, %212 : vector<8x40xf32>
    %214 = arith.addf %213, %18 : vector<8x40xf32>
    %215 = vector.extract_strided_slice %214 {offsets = [0, 0], sizes = [8, 30], strides = [1, 1]} : vector<8x40xf32> to vector<8x30xf32>
    %216 = arith.negf %215 : vector<8x30xf32>
    %217 = math.exp %216 : vector<8x30xf32>
    %cst_36 = arith.constant 1.000000e+00 : f32
    %218 = vector.broadcast %cst_36 : f32 to vector<8x30xf32>
    %219 = arith.addf %218, %217 : vector<8x30xf32>
    %220 = arith.divf %218, %219 : vector<8x30xf32>
    %221 = vector.extract_strided_slice %214 {offsets = [0, 30], sizes = [8, 10], strides = [1, 1]} : vector<8x40xf32> to vector<8x10xf32>
    %222 = math.tanh %221 : vector<8x10xf32>
    %223 = vector.extract_strided_slice %220 {offsets = [0, 0], sizes = [8, 10], strides = [1, 1]} : vector<8x30xf32> to vector<8x10xf32>
    %224 = vector.extract_strided_slice %220 {offsets = [0, 10], sizes = [8, 10], strides = [1, 1]} : vector<8x30xf32> to vector<8x10xf32>
    %225 = vector.extract_strided_slice %220 {offsets = [0, 20], sizes = [8, 10], strides = [1, 1]} : vector<8x30xf32> to vector<8x10xf32>
    %226 = arith.mulf %224, %202 : vector<8x10xf32>
    %227 = arith.mulf %223, %222 : vector<8x10xf32>
    %228 = arith.addf %226, %227 : vector<8x10xf32>
    %229 = math.tanh %228 : vector<8x10xf32>
    %230 = arith.mulf %225, %229 : vector<8x10xf32>
    %231 = tpu.concatenate %125, %152, %178, %204, %230 in 0 : vector<8x10xf32>, vector<8x10xf32>, vector<8x10xf32>, vector<8x10xf32>, vector<8x10xf32> -> vector<40x10xf32>
    %cst_37 = arith.constant dense<0.000000e+00> : vector<40x4xf32>
    %232 = tpu.matmul %231, %7, %cst_37 {dimension_numbers = #tpu.dot_dimension_numbers<[1], [0], [0], [1], [0, 0, 1, 1], [], []>, precision = #tpu.contract_precision<fp32>} : vector<40x10xf32>, vector<10x4xf32>, vector<40x4xf32> -> vector<40x4xf32>
    %233 = arith.addf %232, %20 : vector<40x4xf32>
    %c0_38 = arith.constant 0 : index
    %c0_39 = arith.constant 0 : index
    %234 = vector.load %arg3[%c0_38, %c0_39] : memref<40x4xf32, #tpu.memory_space<vmem>>, vector<40x4xf32>
    tpu.vector_store %arg3[%c0_38, %c0_39], %233 {strides = array<i32>} : memref<40x4xf32, #tpu.memory_space<vmem>>, vector<40x4xf32>,
    return
  }
}

</mosaic_0001>

<llo_original>
// kernel: tpu_custom_call.1
$region0: #{tpu_custom_call.1}
  #allocation0 [shape = 'u32[]', space=smem, size = 0x4, offset = 0x4, fixed_abs, tag = 'smem constant byte address 0x4 - core index']
  #allocation1 [shape = 'u32[144,128]{1,0:T(1,128)}', space=vmem, size = 0x12000, scoped, tag = 'internal scratch']
  %s0 = inlined_call_operand.vmem [shape: f32[8,4], index: 0, kind: input, shape index: {}]
  %s1 = inlined_call_operand.vmem [shape: f32[26,40], index: 1, kind: input, shape index: {}]
  %s2 = inlined_call_operand.vmem [shape: f32[11,4], index: 2, kind: input, shape index: {}]
  %s3 = inlined_call_operand.vmem [shape: f32[40,4], index: 3, kind: output, shape index: {0}]
  %s4 = inlined_call_operand.hbm [shape: f32[2,10], index: 4, kind: output, shape index: {1}]
  %5 = xla_tuple %s3, %s4
  %s6 = sld [smem:[#allocation0]]
  $region30: #{tpu_custom_call.1} parent=0
    _
  %s8 = ssub.s32 1, %s6
  %s9 = scalar_select 0, %s8, %s6
  $region1: #{tpu_custom_call.1} parent=0
    #allocation2 [shape = 'u8[1024]{0}', space=vmem, size = 0x400, scoped, tag = 'output window, operand 1, single buffered']
    #allocation3 [shape = 's32[1]{0}', space=sflag, size = 0x4, scoped, tag = 'scoped memory for tpu_custom_call.1']
    %10 = vsyncpa [#allocation3], 0
    // Predicated region
    $region2: #{tpu_custom_call.1} parent=1 // pred_check
      _
    $region3: #{tpu_custom_call.1} parent=1 // pred_check_branch
      %12 = sbr.rel (0) target = $region5
    $region4: #{tpu_custom_call.1} parent=1 // pred_region
      _
    $region5: #{tpu_custom_call.1} parent=1 // pred_fallthru
      _
    // Predicated region
    $region6: #{tpu_custom_call.1} parent=1 // pred_check
      _
    $region7: #{tpu_custom_call.1} parent=1 // pred_check_branch
      %14 = sbr.rel (0) target = $region9
    $region8: #{tpu_custom_call.1} parent=1 // pred_region
      _
    $region9: #{tpu_custom_call.1} parent=1 // pred_fallthru
      _
    // Predicated region
    $region10: #{tpu_custom_call.1} parent=1 // pred_check
      _
    $region11: #{tpu_custom_call.1} parent=1 // pred_check_branch
      %16 = sbr.rel (0) target = $region13
    $region12: #{tpu_custom_call.1} parent=1 // pred_region
      _
    $region13: #{tpu_custom_call.1} parent=1 // pred_fallthru
      _
    %v18 = vld [vmem:[%s1] sm:$0xff]
    %v19 = vld [vmem:[%s1 + $0x8] sm:$0xff]
    %v20 = vld [vmem:[%s1 + $0x10] sm:$0xff]
    %v21 = vld [vmem:[%s1 + $0x18] sm:$0x3]
    %v22 = vld [vmem:[%s2] sm:$0xff]
    %v23 = vld [vmem:[%s2 + $0x8] sm:$0x7]
    %v24 = vpack.c.bf16 %v19, %v18
    %v25 = vunpack.c.l.bf16 %v24
    %v26 = vunpack.c.h.bf16 %v24
    %v27 = vsub.f32 %v18, %v25
    %v28 = vsub.f32 %v19, %v26
    %v29 = vpack.c.bf16 %v28, %v27
    %v30 = vpack.c.bf16 %v20, %v19
    %v31 = vunpack.c.l.bf16 %v30
    %v32 = vunpack.c.h.bf16 %v30
    %v33 = vsub.f32 %v19, %v31
    %v34 = vsub.f32 %v20, %v32
    %v35 = vpack.c.bf16 %v34, %v33
    %v36 = vlaneseq
    %v37 = vshrl.u32 %v36, 7
    %v38 = vsub.s32 1, %v37
    %v39 = vrot.slane %v21, %v38
    %v40 = vlaneseq
    %v41 = vshrl.u32 %v40, 7
    %v42 = vsub.s32 2, %v41
    %v43 = vrot.slane %v23, %v42
    %v44 = vld [vmem:[%s0] sm:$0xff]
    %v45 = vlaneseq
    %v46 = vshrl.u32 %v45, 7
    %v47 = vsub.s32 0, %v46
    %v48 = vrot.slane %v21, %v47
    %vm49 = vcmask 31744
    %v51 = vsel %vm49, %v44, 0
    %vm53 = vcmask 1043456
    %v55 = vsel %vm53, %v18, 0
    %57 = vmatprep.subr.mxu0 0.0
    %v58 = vand.u32 %v55, 4294901760
    %59 = vmatpush1.msra.mxu0 %v58
    %60 = vmatprep.subr.mxu0 0.0
    %61 = vmatpush1.msra.mxu0 0.0
    %62 = vmatprep.subr.mxu0 0.0
    %63 = vmatpush1.msra.mxu0 0.0
    %64 = vmatprep.subr.mxu0 0.0
    %65 = vmatpush1.msra.mxu0 0.0
    %66 = vmatprep.subr.mxu0 0.0
    %67 = vmatpush1.msra.mxu0 0.0
    %68 = vmatprep.subr.mxu0 0.0
    %69 = vmatpush1.msra.mxu0 0.0
    %70 = vmatprep.subr.mxu0 0.0
    %71 = vmatpush1.msra.mxu0 0.0
    %72 = vmatprep.subr.mxu0 0.0
    %73 = vmatpush1.msra.mxu0 0.0
    %74 = vmatprep.subr.mxu0 0.0
    %75 = vmatpush1.msra.mxu0 0.0
    %76 = vmatprep.subr.mxu0 0.0
    %77 = vmatpush1.msra.mxu0 0.0
    %78 = vmatprep.subr.mxu0 0.0
    %79 = vmatpush1.msra.mxu0 0.0
    %80 = vmatprep.subr.mxu0 0.0
    %81 = vmatpush1.msra.mxu0 0.0
    %82 = vmatprep.subr.mxu0 0.0
    %83 = vmatpush1.msra.mxu0 0.0
    %84 = vmatprep.subr.mxu0 0.0
    %85 = vmatpush1.msra.mxu0 0.0
    %86 = vmatprep.subr.mxu0 0.0
    %87 = vmatpush1.msra.mxu0 0.0
    %88 = vmatprep.subr.mxu0 0.0
    %89 = vmatpush1.msra.mxu0 0.0
    %90 = vmatprep.subr.mxu0 0.0
    %91 = vmatpush1.msra.mxu0 0.0
    %92 = vmatprep.subr.mxu0 0.0
    %93 = vmatpush1.msra.mxu0 0.0
    %94 = vmatprep.subr.mxu0 0.0
    %95 = vmatpush1.msra.mxu0 0.0
    %96 = vmatprep.subr.mxu0 0.0
    %97 = vmatpush1.msra.mxu0 0.0
    %98 = vmatprep.subr.mxu0 0.0
    %99 = vmatpush1.msra.mxu0 0.0
    %100 = vmatprep.subr.mxu0 0.0
    %101 = vmatpush1.msra.mxu0 0.0
    %102 = vmatprep.subr.mxu0 0.0
    %103 = vmatpush1.msra.mxu0 0.0
    %104 = vmatprep.subr.mxu0 0.0
    %105 = vmatpush1.msra.mxu0 0.0
    %106 = vmatprep.subr.mxu0 0.0
    %107 = vmatpush1.msra.mxu0 0.0
    %108 = vmatprep.subr.mxu0 0.0
    %109 = vmatpush1.msra.mxu0 0.0
    %110 = vmatprep.subr.mxu0 0.0
    %111 = vmatpush1.msra.mxu0 0.0
    %112 = vmatprep.subr.mxu0 0.0
    %113 = vmatpush1.msra.mxu0 0.0
    %114 = vmatprep.subr.mxu0 0.0
    %115 = vmatpush1.msra.mxu0 0.0
    %116 = vmatprep.subr.mxu0 0.0
    %117 = vmatpush1.msra.mxu0 0.0
    %118 = vmatprep.subr.mxu0 0.0
    %119 = vmatpush1.msra.mxu0 0.0
    %120 = vmatprep.subr.mxu0 0.0
    %121 = vmatpush1.msra.mxu0 0.0
    %122 = vmatprep.mubr.f32.mxu0 0.0
    %v123 = vand.u32 %v51, 4294901760
    %v124 = vsub.f32 %v51, %v123
    %v125 = vand.u32 %v124, 4294901760
    %v126 = vsub.f32 %v124, %v125
    %v127 = vand.u32 %v126, 4294901760
    %128 = vmatmul.mubr.f32.gmra.mrb[0].mxu0 %v127
    %v129 = vpop.f32.mrb[0].mxu0
    %v130 = vadd.f32 %v48, %v129
    %v131 = vpop.f32.mrb[0].mxu0
    %132 = vdwg.mxu0
    %133 = vmatprep.subr.mxu0 0.0
    %v134 = vand.u32 %v55, 4294901760
    %v135 = vsub.f32 %v55, %v134
    %v136 = vand.u32 %v135, 4294901760
    %v137 = vsub.f32 %v135, %v136
    %v138 = vand.u32 %v137, 4294901760
    %139 = vmatpush1.msra.mxu0 %v138
    %140 = vmatprep.subr.mxu0 0.0
    %141 = vmatpush1.msra.mxu0 0.0
    %142 = vmatprep.subr.mxu0 0.0
    %143 = vmatpush1.msra.mxu0 0.0
    %144 = vmatprep.subr.mxu0 0.0
    %145 = vmatpush1.msra.mxu0 0.0
    %146 = vmatprep.subr.mxu0 0.0
    %147 = vmatpush1.msra.mxu0 0.0
    %148 = vmatprep.subr.mxu0 0.0
    %149 = vmatpush1.msra.mxu0 0.0
    %150 = vmatprep.subr.mxu0 0.0
    %151 = vmatpush1.msra.mxu0 0.0
    %152 = vmatprep.subr.mxu0 0.0
    %153 = vmatpush1.msra.mxu0 0.0
    %154 = vmatprep.subr.mxu0 0.0
    %155 = vmatpush1.msra.mxu0 0.0
    %156 = vmatprep.subr.mxu0 0.0
    %157 = vmatpush1.msra.mxu0 0.0
    %158 = vmatprep.subr.mxu0 0.0
    %159 = vmatpush1.msra.mxu0 0.0
    %160 = vmatprep.subr.mxu0 0.0
    %161 = vmatpush1.msra.mxu0 0.0
    %162 = vmatprep.subr.mxu0 0.0
    %163 = vmatpush1.msra.mxu0 0.0
    %164 = vmatprep.subr.mxu0 0.0
    %165 = vmatpush1.msra.mxu0 0.0
    %166 = vmatprep.subr.mxu0 0.0
    %167 = vmatpush1.msra.mxu0 0.0
    %168 = vmatprep.subr.mxu0 0.0
    %169 = vmatpush1.msra.mxu0 0.0
    %170 = vmatprep.subr.mxu0 0.0
    %171 = vmatpush1.msra.mxu0 0.0
    %172 = vmatprep.subr.mxu0 0.0
    %173 = vmatpush1.msra.mxu0 0.0
    %174 = vmatprep.subr.mxu0 0.0
    %175 = vmatpush1.msra.mxu0 0.0
    %176 = vmatprep.subr.mxu0 0.0
    %177 = vmatpush1.msra.mxu0 0.0
    %178 = vmatprep.subr.mxu0 0.0
    %179 = vmatpush1.msra.mxu0 0.0
    %180 = vmatprep.subr.mxu0 0.0
    %181 = vmatpush1.msra.mxu0 0.0
    %182 = vmatprep.subr.mxu0 0.0
    %183 = vmatpush1.msra.mxu0 0.0
    %184 = vmatprep.subr.mxu0 0.0
    %185 = vmatpush1.msra.mxu0 0.0
    %186 = vmatprep.subr.mxu0 0.0
    %187 = vmatpush1.msra.mxu0 0.0
    %188 = vmatprep.subr.mxu0 0.0
    %189 = vmatpush1.msra.mxu0 0.0
    %190 = vmatprep.subr.mxu0 0.0
    %191 = vmatpush1.msra.mxu0 0.0
    %192 = vmatprep.subr.mxu0 0.0
    %193 = vmatpush1.msra.mxu0 0.0
    %194 = vmatprep.subr.mxu0 0.0
    %195 = vmatpush1.msra.mxu0 0.0
    %196 = vmatprep.subr.mxu0 0.0
    %197 = vmatpush1.msra.mxu0 0.0
    %198 = vmatprep.subr.mxu0 0.0
    %199 = vmatpush1.msra.mxu0 0.0
    %200 = vmatprep.subr.mxu0 0.0
    %201 = vmatpush1.msra.mxu0 0.0
    %202 = vmatprep.mubr.f32.mxu0 0.0
    %v203 = vand.u32 %v51, 4294901760
    %204 = vmatmul.mubr.f32.gmra.mrb[0].mxu0 %v203
    %v205 = vpop.f32.mrb[0].mxu0
    %v206 = vadd.f32 %v130, %v205
    %v207 = vpop.f32.mrb[0].mxu0
    %208 = vdwg.mxu0
    %209 = vmatprep.subr.mxu0 0.0
    %v210 = vand.u32 %v55, 4294901760
    %v211 = vsub.f32 %v55, %v210
    %212 = vmatpush1.msra.mxu0 %v211
    %213 = vmatprep.subr.mxu0 0.0
    %214 = vmatpush1.msra.mxu0 0.0
    %215 = vmatprep.subr.mxu0 0.0
    %216 = vmatpush1.msra.mxu0 0.0
    %217 = vmatprep.subr.mxu0 0.0
    %218 = vmatpush1.msra.mxu0 0.0
    %219 = vmatprep.subr.mxu0 0.0
    %220 = vmatpush1.msra.mxu0 0.0
    %221 = vmatprep.subr.mxu0 0.0
    %222 = vmatpush1.msra.mxu0 0.0
    %223 = vmatprep.subr.mxu0 0.0
    %224 = vmatpush1.msra.mxu0 0.0
    %225 = vmatprep.subr.mxu0 0.0
    %226 = vmatpush1.msra.mxu0 0.0
    %227 = vmatprep.subr.mxu0 0.0
    %228 = vmatpush1.msra.mxu0 0.0
    %229 = vmatprep.subr.mxu0 0.0
    %230 = vmatpush1.msra.mxu0 0.0
    %231 = vmatprep.subr.mxu0 0.0
    %232 = vmatpush1.msra.mxu0 0.0
    %233 = vmatprep.subr.mxu0 0.0
    %234 = vmatpush1.msra.mxu0 0.0
    %235 = vmatprep.subr.mxu0 0.0
    %236 = vmatpush1.msra.mxu0 0.0
    %237 = vmatprep.subr.mxu0 0.0
    %238 = vmatpush1.msra.mxu0 0.0
    %239 = vmatprep.subr.mxu0 0.0
    %240 = vmatpush1.msra.mxu0 0.0
    %241 = vmatprep.subr.mxu0 0.0
    %242 = vmatpush1.msra.mxu0 0.0
    %243 = vmatprep.subr.mxu0 0.0
    %244 = vmatpush1.msra.mxu0 0.0
    %245 = vmatprep.subr.mxu0 0.0
    %246 = vmatpush1.msra.mxu0 0.0
    %247 = vmatprep.subr.mxu0 0.0
    %248 = vmatpush1.msra.mxu0 0.0
    %249 = vmatprep.subr.mxu0 0.0
    %250 = vmatpush1.msra.mxu0 0.0
    %251 = vmatprep.subr.mxu0 0.0
    %252 = vmatpush1.msra.mxu0 0.0
    %253 = vmatprep.subr.mxu0 0.0
    %254 = vmatpush1.msra.mxu0 0.0
    %255 = vmatprep.subr.mxu0 0.0
    %256 = vmatpush1.msra.mxu0 0.0
    %257 = vmatprep.subr.mxu0 0.0
    %258 = vmatpush1.msra.mxu0 0.0
    %259 = vmatprep.subr.mxu0 0.0
    %260 = vmatpush1.msra.mxu0 0.0
    %261 = vmatprep.subr.mxu0 0.0
    %262 = vmatpush1.msra.mxu0 0.0
    %263 = vmatprep.subr.mxu0 0.0
    %264 = vmatpush1.msra.mxu0 0.0
    %265 = vmatprep.subr.mxu0 0.0
    %266 = vmatpush1.msra.mxu0 0.0
    %267 = vmatprep.subr.mxu0 0.0
    %268 = vmatpush1.msra.mxu0 0.0
    %269 = vmatprep.subr.mxu0 0.0
    %270 = vmatpush1.msra.mxu0 0.0
    %271 = vmatprep.subr.mxu0 0.0
    %272 = vmatpush1.msra.mxu0 0.0
    %273 = vmatprep.subr.mxu0 0.0
    %274 = vmatpush1.msra.mxu0 0.0
    %275 = vmatprep.mubr.f32.mxu0 0.0
    %v276 = vand.u32 %v51, 4294901760
    %v277 = vsub.f32 %v51, %v276
    %278 = vmatmul.mubr.f32.gmra.mrb[0].mxu0 %v277
    %v279 = vpop.f32.mrb[0].mxu0
    %v280 = vadd.f32 %v206, %v279
    %v281 = vpop.f32.mrb[0].mxu0
    %282 = vdwg.mxu0
    %283 = vmatprep.subr.mxu0 0.0
    %v284 = vand.u32 %v55, 4294901760
    %285 = vmatpush1.msra.mxu0 %v284
    %286 = vmatprep.subr.mxu0 0.0
    %287 = vmatpush1.msra.mxu0 0.0
    %288 = vmatprep.subr.mxu0 0.0
    %289 = vmatpush1.msra.mxu0 0.0
    %290 = vmatprep.subr.mxu0 0.0
    %291 = vmatpush1.msra.mxu0 0.0
    %292 = vmatprep.subr.mxu0 0.0
    %293 = vmatpush1.msra.mxu0 0.0
    %294 = vmatprep.subr.mxu0 0.0
    %295 = vmatpush1.msra.mxu0 0.0
    %296 = vmatprep.subr.mxu0 0.0
    %297 = vmatpush1.msra.mxu0 0.0
    %298 = vmatprep.subr.mxu0 0.0
    %299 = vmatpush1.msra.mxu0 0.0
    %300 = vmatprep.subr.mxu0 0.0
    %301 = vmatpush1.msra.mxu0 0.0
    %302 = vmatprep.subr.mxu0 0.0
    %303 = vmatpush1.msra.mxu0 0.0
    %304 = vmatprep.subr.mxu0 0.0
    %305 = vmatpush1.msra.mxu0 0.0
    %306 = vmatprep.subr.mxu0 0.0
    %307 = vmatpush1.msra.mxu0 0.0
    %308 = vmatprep.subr.mxu0 0.0
    %309 = vmatpush1.msra.mxu0 0.0
    %310 = vmatprep.subr.mxu0 0.0
    %311 = vmatpush1.msra.mxu0 0.0
    %312 = vmatprep.subr.mxu0 0.0
    %313 = vmatpush1.msra.mxu0 0.0
    %314 = vmatprep.subr.mxu0 0.0
    %315 = vmatpush1.msra.mxu0 0.0
    %316 = vmatprep.subr.mxu0 0.0
    %317 = vmatpush1.msra.mxu0 0.0
    %318 = vmatprep.subr.mxu0 0.0
    %319 = vmatpush1.msra.mxu0 0.0
    %320 = vmatprep.subr.mxu0 0.0
    %321 = vmatpush1.msra.mxu0 0.0
    %322 = vmatprep.subr.mxu0 0.0
    %323 = vmatpush1.msra.mxu0 0.0
    %324 = vmatprep.subr.mxu0 0.0
    %325 = vmatpush1.msra.mxu0 0.0
    %326 = vmatprep.subr.mxu0 0.0
    %327 = vmatpush1.msra.mxu0 0.0
    %328 = vmatprep.subr.mxu0 0.0
    %329 = vmatpush1.msra.mxu0 0.0
    %330 = vmatprep.subr.mxu0 0.0
    %331 = vmatpush1.msra.mxu0 0.0
    %332 = vmatprep.subr.mxu0 0.0
    %333 = vmatpush1.msra.mxu0 0.0
    %334 = vmatprep.subr.mxu0 0.0
    %335 = vmatpush1.msra.mxu0 0.0
    %336 = vmatprep.subr.mxu0 0.0
    %337 = vmatpush1.msra.mxu0 0.0
    %338 = vmatprep.subr.mxu0 0.0
    %339 = vmatpush1.msra.mxu0 0.0
    %340 = vmatprep.subr.mxu0 0.0
    %341 = vmatpush1.msra.mxu0 0.0
    %342 = vmatprep.subr.mxu0 0.0
    %343 = vmatpush1.msra.mxu0 0.0
    %344 = vmatprep.subr.mxu0 0.0
    %345 = vmatpush1.msra.mxu0 0.0
    %346 = vmatprep.subr.mxu0 0.0
    %347 = vmatpush1.msra.mxu0 0.0
    %348 = vmatprep.mubr.f32.mxu0 0.0
    %v349 = vand.u32 %v51, 4294901760
    %v350 = vsub.f32 %v51, %v349
    %v351 = vand.u32 %v350, 4294901760
    %352 = vmatmul.mubr.f32.gmra.mrb[0].mxu0 %v351
    %v353 = vpop.f32.mrb[0].mxu0
    %v354 = vadd.f32 %v280, %v353
    %v355 = vpop.f32.mrb[0].mxu0
    %356 = vdwg.mxu0
    %357 = vmatprep.subr.mxu0 0.0
    %v358 = vand.u32 %v55, 4294901760
    %v359 = vsub.f32 %v55, %v358
    %v360 = vand.u32 %v359, 4294901760
    %361 = vmatpush1.msra.mxu0 %v360
    %362 = vmatprep.subr.mxu0 0.0
    %363 = vmatpush1.msra.mxu0 0.0
    %364 = vmatprep.subr.mxu0 0.0
    %365 = vmatpush1.msra.mxu0 0.0
    %366 = vmatprep.subr.mxu0 0.0
    %367 = vmatpush1.msra.mxu0 0.0
    %368 = vmatprep.subr.mxu0 0.0
    %369 = vmatpush1.msra.mxu0 0.0
    %370 = vmatprep.subr.mxu0 0.0
    %371 = vmatpush1.msra.mxu0 0.0
    %372 = vmatprep.subr.mxu0 0.0
    %373 = vmatpush1.msra.mxu0 0.0
    %374 = vmatprep.subr.mxu0 0.0
    %375 = vmatpush1.msra.mxu0 0.0
    %376 = vmatprep.subr.mxu0 0.0
    %377 = vmatpush1.msra.mxu0 0.0
    %378 = vmatprep.subr.mxu0 0.0
    %379 = vmatpush1.msra.mxu0 0.0
    %380 = vmatprep.subr.mxu0 0.0
    %381 = vmatpush1.msra.mxu0 0.0
    %382 = vmatprep.subr.mxu0 0.0
    %383 = vmatpush1.msra.mxu0 0.0
    %384 = vmatprep.subr.mxu0 0.0
    %385 = vmatpush1.msra.mxu0 0.0
    %386 = vmatprep.subr.mxu0 0.0
    %387 = vmatpush1.msra.mxu0 0.0
    %388 = vmatprep.subr.mxu0 0.0
    %389 = vmatpush1.msra.mxu0 0.0
    %390 = vmatprep.subr.mxu0 0.0
    %391 = vmatpush1.msra.mxu0 0.0
    %392 = vmatprep.subr.mxu0 0.0
    %393 = vmatpush1.msra.mxu0 0.0
    %394 = vmatprep.subr.mxu0 0.0
    %395 = vmatpush1.msra.mxu0 0.0
    %396 = vmatprep.subr.mxu0 0.0
    %397 = vmatpush1.msra.mxu0 0.0
    %398 = vmatprep.subr.mxu0 0.0
    %399 = vmatpush1.msra.mxu0 0.0
    %400 = vmatprep.subr.mxu0 0.0
    %401 = vmatpush1.msra.mxu0 0.0
    %402 = vmatprep.subr.mxu0 0.0
    %403 = vmatpush1.msra.mxu0 0.0
    %404 = vmatprep.subr.mxu0 0.0
    %405 = vmatpush1.msra.mxu0 0.0
    %406 = vmatprep.subr.mxu0 0.0
    %407 = vmatpush1.msra.mxu0 0.0
    %408 = vmatprep.subr.mxu0 0.0
    %409 = vmatpush1.msra.mxu0 0.0
    %410 = vmatprep.subr.mxu0 0.0
    %411 = vmatpush1.msra.mxu0 0.0
    %412 = vmatprep.subr.mxu0 0.0
    %413 = vmatpush1.msra.mxu0 0.0
    %414 = vmatprep.subr.mxu0 0.0
    %415 = vmatpush1.msra.mxu0 0.0
    %416 = vmatprep.subr.mxu0 0.0
    %417 = vmatpush1.msra.mxu0 0.0
    %418 = vmatprep.subr.mxu0 0.0
    %419 = vmatpush1.msra.mxu0 0.0
    %420 = vmatprep.subr.mxu0 0.0
    %421 = vmatpush1.msra.mxu0 0.0
    %422 = vmatprep.subr.mxu0 0.0
    %423 = vmatpush1.msra.mxu0 0.0
    %424 = vmatprep.mubr.f32.mxu0 0.0
    %v425 = vand.u32 %v51, 4294901760
    %426 = vmatmul.mubr.f32.gmra.mrb[0].mxu0 %v425
    %v427 = vpop.f32.mrb[0].mxu0
    %v428 = vadd.f32 %v354, %v427
    %v429 = vpop.f32.mrb[0].mxu0
    %430 = vdwg.mxu0
    %431 = vmatprep.subr.mxu0 0.0
    %v432 = vand.u32 %v55, 4294901760
    %433 = vmatpush1.msra.mxu0 %v432
    %434 = vmatprep.subr.mxu0 0.0
    %435 = vmatpush1.msra.mxu0 0.0
    %436 = vmatprep.subr.mxu0 0.0
    %437 = vmatpush1.msra.mxu0 0.0
    %438 = vmatprep.subr.mxu0 0.0
    %439 = vmatpush1.msra.mxu0 0.0
    %440 = vmatprep.subr.mxu0 0.0
    %441 = vmatpush1.msra.mxu0 0.0
    %442 = vmatprep.subr.mxu0 0.0
    %443 = vmatpush1.msra.mxu0 0.0
    %444 = vmatprep.subr.mxu0 0.0
    %445 = vmatpush1.msra.mxu0 0.0
    %446 = vmatprep.subr.mxu0 0.0
    %447 = vmatpush1.msra.mxu0 0.0
    %448 = vmatprep.subr.mxu0 0.0
    %449 = vmatpush1.msra.mxu0 0.0
    %450 = vmatprep.subr.mxu0 0.0
    %451 = vmatpush1.msra.mxu0 0.0
    %452 = vmatprep.subr.mxu0 0.0
    %453 = vmatpush1.msra.mxu0 0.0
    %454 = vmatprep.subr.mxu0 0.0
    %455 = vmatpush1.msra.mxu0 0.0
    %456 = vmatprep.subr.mxu0 0.0
    %457 = vmatpush1.msra.mxu0 0.0
    %458 = vmatprep.subr.mxu0 0.0
    %459 = vmatpush1.msra.mxu0 0.0
    %460 = vmatprep.subr.mxu0 0.0
    %461 = vmatpush1.msra.mxu0 0.0
    %462 = vmatprep.subr.mxu0 0.0
    %463 = vmatpush1.msra.mxu0 0.0
    %464 = vmatprep.subr.mxu0 0.0
    %465 = vmatpush1.msra.mxu0 0.0
    %466 = vmatprep.subr.mxu0 0.0
    %467 = vmatpush1.msra.mxu0 0.0
    %468 = vmatprep.subr.mxu0 0.0
    %469 = vmatpush1.msra.mxu0 0.0
    %470 = vmatprep.subr.mxu0 0.0
    %471 = vmatpush1.msra.mxu0 0.0
    %472 = vmatprep.subr.mxu0 0.0
    %473 = vmatpush1.msra.mxu0 0.0
    %474 = vmatprep.subr.mxu0 0.0
    %475 = vmatpush1.msra.mxu0 0.0
    %476 = vmatprep.subr.mxu0 0.0
    %477 = vmatpush1.msra.mxu0 0.0
    %478 = vmatprep.subr.mxu0 0.0
    %479 = vmatpush1.msra.mxu0 0.0
    %480 = vmatprep.subr.mxu0 0.0
    %481 = vmatpush1.msra.mxu0 0.0
    %482 = vmatprep.subr.mxu0 0.0
    %483 = vmatpush1.msra.mxu0 0.0
    %484 = vmatprep.subr.mxu0 0.0
    %485 = vmatpush1.msra.mxu0 0.0
    %486 = vmatprep.subr.mxu0 0.0
    %487 = vmatpush1.msra.mxu0 0.0
    %488 = vmatprep.subr.mxu0 0.0
    %489 = vmatpush1.msra.mxu0 0.0
    %490 = vmatprep.subr.mxu0 0.0
    %491 = vmatpush1.msra.mxu0 0.0
    %492 = vmatprep.subr.mxu0 0.0
    %493 = vmatpush1.msra.mxu0 0.0
    %494 = vmatprep.subr.mxu0 0.0
    %495 = vmatpush1.msra.mxu0 0.0
    %496 = vmatprep.mubr.f32.mxu0 0.0
    %v497 = vand.u32 %v51, 4294901760
    %498 = vmatmul.mubr.f32.gmra.mrb[0].mxu0 %v497
    %v499 = vpop.f32.mrb[0].mxu0
    %v500 = vadd.f32 %v428, %v499
    %v501 = vpop.f32.mrb[0].mxu0
    %502 = vdwg.mxu0
    %v503 = vxor.u32 %v500, 2147483648
    %v504 = vmul.f32 %v503, 1.442695
    %v505 = vpow.pop %v504
    %v506 = vadd.f32 %v505, 1.0
    %v507 = vrcp.pop %v506
    %v508 = vmul.f32 1.0, %v507
    %v509 = vtanh.pop %v500
    %v510 = vmul.f32 %v508, 0.0
    %512 = vrot.lane.b32.xlu0 %v509, 98
    %v513 = vpop.permute.xlu0 %512
    %v515 = vmul.f32 %v508, %v513
    %517 = vrot.lane.b32.xlu0 %v515, 10
    %v518 = vpop.permute.xlu0 %517
    %v520 = vadd.f32 %v510, %v518
    %v521 = vtanh.pop %v520
    %523 = vrot.lane.b32.xlu0 %v521, 10
    %v524 = vpop.permute.xlu0 %523
    %v526 = vmul.f32 %v508, %v524
    %v527 = vpack.c.bf16 %v526, %v526
    %v528 = vunpack.c.l.bf16 %v527
    %v529 = vsub.f32 %v526, %v528
    %v530 = vpack.c.bf16 %v529, %v529
    %532 = vrot.lane.b32.xlu0 %v527, 108
    %v533 = vpop.permute.xlu0 %532
    %v535 = vrot.slane %v29, 2
    %vm536 = vcmask 80896
    %v538 = vsel %vm536, %v533, 0
    %vm540 = vcmask 1044480
    %v542 = vsel %vm540, %v535, 0
    %544 = vmatprep.subr.bf16.mxu0 0
    %545 = vmatpush1.bf16.msra.mxu0 %v542
    %546 = vmatprep.subr.bf16.mxu0 0
    %547 = vmatpush1.bf16.msra.mxu0 0
    %548 = vmatprep.subr.bf16.mxu0 0
    %549 = vmatpush1.bf16.msra.mxu0 0
    %550 = vmatprep.subr.bf16.mxu0 0
    %551 = vmatpush1.bf16.msra.mxu0 0
    %552 = vmatprep.subr.bf16.mxu0 0
    %553 = vmatpush1.bf16.msra.mxu0 0
    %554 = vmatprep.subr.bf16.mxu0 0
    %555 = vmatpush1.bf16.msra.mxu0 0
    %556 = vmatprep.subr.bf16.mxu0 0
    %557 = vmatpush1.bf16.msra.mxu0 0
    %558 = vmatprep.subr.bf16.mxu0 0
    %559 = vmatpush1.bf16.msra.mxu0 0
    %560 = vmatprep.subr.bf16.mxu0 0
    %561 = vmatpush1.bf16.msra.mxu0 0
    %562 = vmatprep.subr.bf16.mxu0 0
    %563 = vmatpush1.bf16.msra.mxu0 0
    %564 = vmatprep.subr.bf16.mxu0 0
    %565 = vmatpush1.bf16.msra.mxu0 0
    %566 = vmatprep.subr.bf16.mxu0 0
    %567 = vmatpush1.bf16.msra.mxu0 0
    %568 = vmatprep.subr.bf16.mxu0 0
    %569 = vmatpush1.bf16.msra.mxu0 0
    %570 = vmatprep.subr.bf16.mxu0 0
    %571 = vmatpush1.bf16.msra.mxu0 0
    %572 = vmatprep.subr.bf16.mxu0 0
    %573 = vmatpush1.bf16.msra.mxu0 0
    %574 = vmatprep.subr.bf16.mxu0 0
    %575 = vmatpush1.bf16.msra.mxu0 0
    %576 = vmatprep.mubr.bf16.mxu0 0
    %577 = vmatmul.mubr.bf16.gmra.mrb[0].mxu0 %v538
    %v578 = vpop.f32.mrb[0].mxu0
    %v579 = vadd.f32 0.0, %v578
    %v580 = vpop.f32.mrb[0].mxu0
    %v581 = vpop.f32.mrb[0].mxu0
    %v582 = vpop.f32.mrb[0].mxu0
    %583 = vdwg.mxu0
    %v585 = vrot.slane %v24, 2
    %v587 = vsel %vm540, %v585, 0
    %589 = vmatprep.subr.bf16.mxu0 0
    %590 = vmatpush1.bf16.msra.mxu0 %v587
    %591 = vmatprep.subr.bf16.mxu0 0
    %592 = vmatpush1.bf16.msra.mxu0 0
    %593 = vmatprep.subr.bf16.mxu0 0
    %594 = vmatpush1.bf16.msra.mxu0 0
    %595 = vmatprep.subr.bf16.mxu0 0
    %596 = vmatpush1.bf16.msra.mxu0 0
    %597 = vmatprep.subr.bf16.mxu0 0
    %598 = vmatpush1.bf16.msra.mxu0 0
    %599 = vmatprep.subr.bf16.mxu0 0
    %600 = vmatpush1.bf16.msra.mxu0 0
    %601 = vmatprep.subr.bf16.mxu0 0
    %602 = vmatpush1.bf16.msra.mxu0 0
    %603 = vmatprep.subr.bf16.mxu0 0
    %604 = vmatpush1.bf16.msra.mxu0 0
    %605 = vmatprep.subr.bf16.mxu0 0
    %606 = vmatpush1.bf16.msra.mxu0 0
    %607 = vmatprep.subr.bf16.mxu0 0
    %608 = vmatpush1.bf16.msra.mxu0 0
    %609 = vmatprep.subr.bf16.mxu0 0
    %610 = vmatpush1.bf16.msra.mxu0 0
    %611 = vmatprep.subr.bf16.mxu0 0
    %612 = vmatpush1.bf16.msra.mxu0 0
    %613 = vmatprep.subr.bf16.mxu0 0
    %614 = vmatpush1.bf16.msra.mxu0 0
    %615 = vmatprep.subr.bf16.mxu0 0
    %616 = vmatpush1.bf16.msra.mxu0 0
    %617 = vmatprep.subr.bf16.mxu0 0
    %618 = vmatpush1.bf16.msra.mxu0 0
    %619 = vmatprep.subr.bf16.mxu0 0
    %620 = vmatpush1.bf16.msra.mxu0 0
    %621 = vmatprep.mubr.bf16.mxu0 0
    %622 = vmatmul.mubr.bf16.gmra.mrb[0].mxu0 %v538
    %v623 = vpop.f32.mrb[0].mxu0
    %v624 = vadd.f32 %v579, %v623
    %v625 = vpop.f32.mrb[0].mxu0
    %v626 = vpop.f32.mrb[0].mxu0
    %v627 = vpop.f32.mrb[0].mxu0
    %628 = vdwg.mxu0
    %630 = vrot.lane.b32.xlu0 %v530, 108
    %v631 = vpop.permute.xlu0 %630
    %v633 = vsel %vm536, %v631, 0
    %635 = vmatprep.subr.bf16.mxu0 0
    %636 = vmatpush1.bf16.msra.mxu0 %v587
    %637 = vmatprep.subr.bf16.mxu0 0
    %638 = vmatpush1.bf16.msra.mxu0 0
    %639 = vmatprep.subr.bf16.mxu0 0
    %640 = vmatpush1.bf16.msra.mxu0 0
    %641 = vmatprep.subr.bf16.mxu0 0
    %642 = vmatpush1.bf16.msra.mxu0 0
    %643 = vmatprep.subr.bf16.mxu0 0
    %644 = vmatpush1.bf16.msra.mxu0 0
    %645 = vmatprep.subr.bf16.mxu0 0
    %646 = vmatpush1.bf16.msra.mxu0 0
    %647 = vmatprep.subr.bf16.mxu0 0
    %648 = vmatpush1.bf16.msra.mxu0 0
    %649 = vmatprep.subr.bf16.mxu0 0
    %650 = vmatpush1.bf16.msra.mxu0 0
    %651 = vmatprep.subr.bf16.mxu0 0
    %652 = vmatpush1.bf16.msra.mxu0 0
    %653 = vmatprep.subr.bf16.mxu0 0
    %654 = vmatpush1.bf16.msra.mxu0 0
    %655 = vmatprep.subr.bf16.mxu0 0
    %656 = vmatpush1.bf16.msra.mxu0 0
    %657 = vmatprep.subr.bf16.mxu0 0
    %658 = vmatpush1.bf16.msra.mxu0 0
    %659 = vmatprep.subr.bf16.mxu0 0
    %660 = vmatpush1.bf16.msra.mxu0 0
    %661 = vmatprep.subr.bf16.mxu0 0
    %662 = vmatpush1.bf16.msra.mxu0 0
    %663 = vmatprep.subr.bf16.mxu0 0
    %664 = vmatpush1.bf16.msra.mxu0 0
    %665 = vmatprep.subr.bf16.mxu0 0
    %666 = vmatpush1.bf16.msra.mxu0 0
    %667 = vmatprep.mubr.bf16.mxu0 0
    %668 = vmatmul.mubr.bf16.gmra.mrb[0].mxu0 %v633
    %v669 = vpop.f32.mrb[0].mxu0
    %v670 = vadd.f32 0.0, %v669
    %v671 = vpop.f32.mrb[0].mxu0
    %v672 = vpop.f32.mrb[0].mxu0
    %v673 = vpop.f32.mrb[0].mxu0
    %674 = vdwg.mxu0
    %v675 = vadd.f32 %v624, %v670
    %v677 = vrot.slane %v675, 6
    %v679 = vadd.f32 %v500, %v677
    %v680 = vxor.u32 %v679, 2147483648
    %v681 = vmul.f32 %v680, 1.442695
    %v682 = vpow.pop %v681
    %v683 = vadd.f32 %v682, 1.0
    %v684 = vrcp.pop %v683
    %v685 = vmul.f32 1.0, %v684
    %v686 = vtanh.pop %v679
    %v688 = vrot.slane %v520, 6
    %v690 = vmul.f32 %v685, %v688
    %692 = vrot.lane.b32.xlu0 %v686, 98
    %v693 = vpop.permute.xlu0 %692
    %v695 = vmul.f32 %v685, %v693
    %697 = vrot.lane.b32.xlu0 %v695, 10
    %v698 = vpop.permute.xlu0 %697
    %v700 = vadd.f32 %v690, %v698
    %v701 = vtanh.pop %v700
    %703 = vrot.lane.b32.xlu0 %v701, 10
    %v704 = vpop.permute.xlu0 %703
    %v706 = vmul.f32 %v685, %v704
    %v707 = vpack.c.bf16 %v706, %v706
    %v708 = vunpack.c.l.bf16 %v707
    %v709 = vsub.f32 %v706, %v708
    %v710 = vpack.c.bf16 %v709, %v709
    %v712 = vrot.slane %v707, 1
    %713 = vrot.lane.b32.xlu0 %v712, 108
    %v714 = vpop.permute.xlu0 %713
    %v716 = vsel %vm536, %v714, 0
    %718 = vmatprep.subr.bf16.mxu0 0
    %719 = vmatpush1.bf16.msra.mxu0 %v542
    %720 = vmatprep.subr.bf16.mxu0 0
    %721 = vmatpush1.bf16.msra.mxu0 0
    %722 = vmatprep.subr.bf16.mxu0 0
    %723 = vmatpush1.bf16.msra.mxu0 0
    %724 = vmatprep.subr.bf16.mxu0 0
    %725 = vmatpush1.bf16.msra.mxu0 0
    %726 = vmatprep.subr.bf16.mxu0 0
    %727 = vmatpush1.bf16.msra.mxu0 0
    %728 = vmatprep.subr.bf16.mxu0 0
    %729 = vmatpush1.bf16.msra.mxu0 0
    %730 = vmatprep.subr.bf16.mxu0 0
    %731 = vmatpush1.bf16.msra.mxu0 0
    %732 = vmatprep.subr.bf16.mxu0 0
    %733 = vmatpush1.bf16.msra.mxu0 0
    %734 = vmatprep.subr.bf16.mxu0 0
    %735 = vmatpush1.bf16.msra.mxu0 0
    %736 = vmatprep.subr.bf16.mxu0 0
    %737 = vmatpush1.bf16.msra.mxu0 0
    %738 = vmatprep.subr.bf16.mxu0 0
    %739 = vmatpush1.bf16.msra.mxu0 0
    %740 = vmatprep.subr.bf16.mxu0 0
    %741 = vmatpush1.bf16.msra.mxu0 0
    %742 = vmatprep.subr.bf16.mxu0 0
    %743 = vmatpush1.bf16.msra.mxu0 0
    %744 = vmatprep.subr.bf16.mxu0 0
    %745 = vmatpush1.bf16.msra.mxu0 0
    %746 = vmatprep.subr.bf16.mxu0 0
    %747 = vmatpush1.bf16.msra.mxu0 0
    %748 = vmatprep.subr.bf16.mxu0 0
    %749 = vmatpush1.bf16.msra.mxu0 0
    %750 = vmatprep.mubr.bf16.mxu0 0
    %751 = vmatmul.mubr.bf16.gmra.mrb[0].mxu0 %v716
    %v752 = vpop.f32.mrb[0].mxu0
    %v753 = vadd.f32 0.0, %v752
    %v754 = vpop.f32.mrb[0].mxu0
    %v755 = vpop.f32.mrb[0].mxu0
    %v756 = vpop.f32.mrb[0].mxu0
    %757 = vdwg.mxu0
    %758 = vmatprep.subr.bf16.mxu0 0
    %759 = vmatpush1.bf16.msra.mxu0 %v587
    %760 = vmatprep.subr.bf16.mxu0 0
    %761 = vmatpush1.bf16.msra.mxu0 0
    %762 = vmatprep.subr.bf16.mxu0 0
    %763 = vmatpush1.bf16.msra.mxu0 0
    %764 = vmatprep.subr.bf16.mxu0 0
    %765 = vmatpush1.bf16.msra.mxu0 0
    %766 = vmatprep.subr.bf16.mxu0 0
    %767 = vmatpush1.bf16.msra.mxu0 0
    %768 = vmatprep.subr.bf16.mxu0 0
    %769 = vmatpush1.bf16.msra.mxu0 0
    %770 = vmatprep.subr.bf16.mxu0 0
    %771 = vmatpush1.bf16.msra.mxu0 0
    %772 = vmatprep.subr.bf16.mxu0 0
    %773 = vmatpush1.bf16.msra.mxu0 0
    %774 = vmatprep.subr.bf16.mxu0 0
    %775 = vmatpush1.bf16.msra.mxu0 0
    %776 = vmatprep.subr.bf16.mxu0 0
    %777 = vmatpush1.bf16.msra.mxu0 0
    %778 = vmatprep.subr.bf16.mxu0 0
    %779 = vmatpush1.bf16.msra.mxu0 0
    %780 = vmatprep.subr.bf16.mxu0 0
    %781 = vmatpush1.bf16.msra.mxu0 0
    %782 = vmatprep.subr.bf16.mxu0 0
    %783 = vmatpush1.bf16.msra.mxu0 0
    %784 = vmatprep.subr.bf16.mxu0 0
    %785 = vmatpush1.bf16.msra.mxu0 0
    %786 = vmatprep.subr.bf16.mxu0 0
    %787 = vmatpush1.bf16.msra.mxu0 0
    %788 = vmatprep.subr.bf16.mxu0 0
    %789 = vmatpush1.bf16.msra.mxu0 0
    %790 = vmatprep.mubr.bf16.mxu0 0
    %791 = vmatmul.mubr.bf16.gmra.mrb[0].mxu0 %v716
    %v792 = vpop.f32.mrb[0].mxu0
    %v793 = vadd.f32 %v753, %v792
    %v794 = vpop.f32.mrb[0].mxu0
    %v795 = vpop.f32.mrb[0].mxu0
    %v796 = vpop.f32.mrb[0].mxu0
    %797 = vdwg.mxu0
    %v799 = vrot.slane %v710, 1
    %800 = vrot.lane.b32.xlu0 %v799, 108
    %v801 = vpop.permute.xlu0 %800
    %v803 = vsel %vm536, %v801, 0
    %805 = vmatprep.subr.bf16.mxu0 0
    %806 = vmatpush1.bf16.msra.mxu0 %v587
    %807 = vmatprep.subr.bf16.mxu0 0
    %808 = vmatpush1.bf16.msra.mxu0 0
    %809 = vmatprep.subr.bf16.mxu0 0
    %810 = vmatpush1.bf16.msra.mxu0 0
    %811 = vmatprep.subr.bf16.mxu0 0
    %812 = vmatpush1.bf16.msra.mxu0 0
    %813 = vmatprep.subr.bf16.mxu0 0
    %814 = vmatpush1.bf16.msra.mxu0 0
    %815 = vmatprep.subr.bf16.mxu0 0
    %816 = vmatpush1.bf16.msra.mxu0 0
    %817 = vmatprep.subr.bf16.mxu0 0
    %818 = vmatpush1.bf16.msra.mxu0 0
    %819 = vmatprep.subr.bf16.mxu0 0
    %820 = vmatpush1.bf16.msra.mxu0 0
    %821 = vmatprep.subr.bf16.mxu0 0
    %822 = vmatpush1.bf16.msra.mxu0 0
    %823 = vmatprep.subr.bf16.mxu0 0
    %824 = vmatpush1.bf16.msra.mxu0 0
    %825 = vmatprep.subr.bf16.mxu0 0
    %826 = vmatpush1.bf16.msra.mxu0 0
    %827 = vmatprep.subr.bf16.mxu0 0
    %828 = vmatpush1.bf16.msra.mxu0 0
    %829 = vmatprep.subr.bf16.mxu0 0
    %830 = vmatpush1.bf16.msra.mxu0 0
    %831 = vmatprep.subr.bf16.mxu0 0
    %832 = vmatpush1.bf16.msra.mxu0 0
    %833 = vmatprep.subr.bf16.mxu0 0
    %834 = vmatpush1.bf16.msra.mxu0 0
    %835 = vmatprep.subr.bf16.mxu0 0
    %836 = vmatpush1.bf16.msra.mxu0 0
    %837 = vmatprep.mubr.bf16.mxu0 0
    %838 = vmatmul.mubr.bf16.gmra.mrb[0].mxu0 %v803
    %v839 = vpop.f32.mrb[0].mxu0
    %v840 = vadd.f32 0.0, %v839
    %v841 = vpop.f32.mrb[0].mxu0
    %v842 = vpop.f32.mrb[0].mxu0
    %v843 = vpop.f32.mrb[0].mxu0
    %844 = vdwg.mxu0
    %v845 = vadd.f32 %v793, %v840
    %v847 = vrot.slane %v845, 4
    %v849 = vadd.f32 %v500, %v847
    %v850 = vxor.u32 %v849, 2147483648
    %v851 = vmul.f32 %v850, 1.442695
    %v852 = vpow.pop %v851
    %v853 = vadd.f32 %v852, 1.0
    %v854 = vrcp.pop %v853
    %v855 = vmul.f32 1.0, %v854
    %v856 = vtanh.pop %v849
    %v858 = vrot.slane %v700, 6
    %v860 = vmul.f32 %v855, %v858
    %862 = vrot.lane.b32.xlu0 %v856, 98
    %v863 = vpop.permute.xlu0 %862
    %v865 = vmul.f32 %v855, %v863
    %867 = vrot.lane.b32.xlu0 %v865, 10
    %v868 = vpop.permute.xlu0 %867
    %v870 = vadd.f32 %v860, %v868
    %v871 = vtanh.pop %v870
    %873 = vrot.lane.b32.xlu0 %v871, 10
    %v874 = vpop.permute.xlu0 %873
    %v876 = vmul.f32 %v855, %v874
    %v877 = vpack.c.bf16 %v876, %v876
    %v878 = vunpack.c.l.bf16 %v877
    %v879 = vsub.f32 %v876, %v878
    %v880 = vpack.c.bf16 %v879, %v879
    %v882 = vrot.slane %v877, 2
    %883 = vrot.lane.b32.xlu0 %v882, 108
    %v884 = vpop.permute.xlu0 %883
    %v886 = vsel %vm536, %v884, 0
    %888 = vmatprep.subr.bf16.mxu0 0
    %889 = vmatpush1.bf16.msra.mxu0 %v542
    %890 = vmatprep.subr.bf16.mxu0 0
    %891 = vmatpush1.bf16.msra.mxu0 0
    %892 = vmatprep.subr.bf16.mxu0 0
    %893 = vmatpush1.bf16.msra.mxu0 0
    %894 = vmatprep.subr.bf16.mxu0 0
    %895 = vmatpush1.bf16.msra.mxu0 0
    %896 = vmatprep.subr.bf16.mxu0 0
    %897 = vmatpush1.bf16.msra.mxu0 0
    %898 = vmatprep.subr.bf16.mxu0 0
    %899 = vmatpush1.bf16.msra.mxu0 0
    %900 = vmatprep.subr.bf16.mxu0 0
    %901 = vmatpush1.bf16.msra.mxu0 0
    %902 = vmatprep.subr.bf16.mxu0 0
    %903 = vmatpush1.bf16.msra.mxu0 0
    %904 = vmatprep.subr.bf16.mxu0 0
    %905 = vmatpush1.bf16.msra.mxu0 0
    %906 = vmatprep.subr.bf16.mxu0 0
    %907 = vmatpush1.bf16.msra.mxu0 0
    %908 = vmatprep.subr.bf16.mxu0 0
    %909 = vmatpush1.bf16.msra.mxu0 0
    %910 = vmatprep.subr.bf16.mxu0 0
    %911 = vmatpush1.bf16.msra.mxu0 0
    %912 = vmatprep.subr.bf16.mxu0 0
    %913 = vmatpush1.bf16.msra.mxu0 0
    %914 = vmatprep.subr.bf16.mxu0 0
    %915 = vmatpush1.bf16.msra.mxu0 0
    %916 = vmatprep.subr.bf16.mxu0 0
    %917 = vmatpush1.bf16.msra.mxu0 0
    %918 = vmatprep.subr.bf16.mxu0 0
    %919 = vmatpush1.bf16.msra.mxu0 0
    %920 = vmatprep.mubr.bf16.mxu0 0
    %921 = vmatmul.mubr.bf16.gmra.mrb[0].mxu0 %v886
    %v922 = vpop.f32.mrb[0].mxu0
    %v923 = vadd.f32 0.0, %v922
    %v924 = vpop.f32.mrb[0].mxu0
    %v925 = vpop.f32.mrb[0].mxu0
    %v926 = vpop.f32.mrb[0].mxu0
    %927 = vdwg.mxu0
    %928 = vmatprep.subr.bf16.mxu0 0
    %929 = vmatpush1.bf16.msra.mxu0 %v587
    %930 = vmatprep.subr.bf16.mxu0 0
    %931 = vmatpush1.bf16.msra.mxu0 0
    %932 = vmatprep.subr.bf16.mxu0 0
    %933 = vmatpush1.bf16.msra.mxu0 0
    %934 = vmatprep.subr.bf16.mxu0 0
    %935 = vmatpush1.bf16.msra.mxu0 0
    %936 = vmatprep.subr.bf16.mxu0 0
    %937 = vmatpush1.bf16.msra.mxu0 0
    %938 = vmatprep.subr.bf16.mxu0 0
    %939 = vmatpush1.bf16.msra.mxu0 0
    %940 = vmatprep.subr.bf16.mxu0 0
    %941 = vmatpush1.bf16.msra.mxu0 0
    %942 = vmatprep.subr.bf16.mxu0 0
    %943 = vmatpush1.bf16.msra.mxu0 0
    %944 = vmatprep.subr.bf16.mxu0 0
    %945 = vmatpush1.bf16.msra.mxu0 0
    %946 = vmatprep.subr.bf16.mxu0 0
    %947 = vmatpush1.bf16.msra.mxu0 0
    %948 = vmatprep.subr.bf16.mxu0 0
    %949 = vmatpush1.bf16.msra.mxu0 0
    %950 = vmatprep.subr.bf16.mxu0 0
    %951 = vmatpush1.bf16.msra.mxu0 0
    %952 = vmatprep.subr.bf16.mxu0 0
    %953 = vmatpush1.bf16.msra.mxu0 0
    %954 = vmatprep.subr.bf16.mxu0 0
    %955 = vmatpush1.bf16.msra.mxu0 0
    %956 = vmatprep.subr.bf16.mxu0 0
    %957 = vmatpush1.bf16.msra.mxu0 0
    %958 = vmatprep.subr.bf16.mxu0 0
    %959 = vmatpush1.bf16.msra.mxu0 0
    %960 = vmatprep.mubr.bf16.mxu0 0
    %961 = vmatmul.mubr.bf16.gmra.mrb[0].mxu0 %v886
    %v962 = vpop.f32.mrb[0].mxu0
    %v963 = vadd.f32 %v923, %v962
    %v964 = vpop.f32.mrb[0].mxu0
    %v965 = vpop.f32.mrb[0].mxu0
    %v966 = vpop.f32.mrb[0].mxu0
    %967 = vdwg.mxu0
    %v969 = vrot.slane %v880, 2
    %970 = vrot.lane.b32.xlu0 %v969, 108
    %v971 = vpop.permute.xlu0 %970
    %v973 = vsel %vm536, %v971, 0
    %975 = vmatprep.subr.bf16.mxu0 0
    %976 = vmatpush1.bf16.msra.mxu0 %v587
    %977 = vmatprep.subr.bf16.mxu0 0
    %978 = vmatpush1.bf16.msra.mxu0 0
    %979 = vmatprep.subr.bf16.mxu0 0
    %980 = vmatpush1.bf16.msra.mxu0 0
    %981 = vmatprep.subr.bf16.mxu0 0
    %982 = vmatpush1.bf16.msra.mxu0 0
    %983 = vmatprep.subr.bf16.mxu0 0
    %984 = vmatpush1.bf16.msra.mxu0 0
    %985 = vmatprep.subr.bf16.mxu0 0
    %986 = vmatpush1.bf16.msra.mxu0 0
    %987 = vmatprep.subr.bf16.mxu0 0
    %988 = vmatpush1.bf16.msra.mxu0 0
    %989 = vmatprep.subr.bf16.mxu0 0
    %990 = vmatpush1.bf16.msra.mxu0 0
    %991 = vmatprep.subr.bf16.mxu0 0
    %992 = vmatpush1.bf16.msra.mxu0 0
    %993 = vmatprep.subr.bf16.mxu0 0
    %994 = vmatpush1.bf16.msra.mxu0 0
    %995 = vmatprep.subr.bf16.mxu0 0
    %996 = vmatpush1.bf16.msra.mxu0 0
    %997 = vmatprep.subr.bf16.mxu0 0
    %998 = vmatpush1.bf16.msra.mxu0 0
    %999 = vmatprep.subr.bf16.mxu0 0
    %1000 = vmatpush1.bf16.msra.mxu0 0
    %1001 = vmatprep.subr.bf16.mxu0 0
    %1002 = vmatpush1.bf16.msra.mxu0 0
    %1003 = vmatprep.subr.bf16.mxu0 0
    %1004 = vmatpush1.bf16.msra.mxu0 0
    %1005 = vmatprep.subr.bf16.mxu0 0
    %1006 = vmatpush1.bf16.msra.mxu0 0
    %1007 = vmatprep.mubr.bf16.mxu0 0
    %1008 = vmatmul.mubr.bf16.gmra.mrb[0].mxu0 %v973
    %v1009 = vpop.f32.mrb[0].mxu0
    %v1010 = vadd.f32 0.0, %v1009
    %v1011 = vpop.f32.mrb[0].mxu0
    %v1012 = vpop.f32.mrb[0].mxu0
    %v1013 = vpop.f32.mrb[0].mxu0
    %1014 = vdwg.mxu0
    %v1015 = vadd.f32 %v963, %v1010
    %v1017 = vrot.slane %v1015, 2
    %v1019 = vadd.f32 %v500, %v1017
    %v1020 = vxor.u32 %v1019, 2147483648
    %v1021 = vmul.f32 %v1020, 1.442695
    %v1022 = vpow.pop %v1021
    %v1023 = vadd.f32 %v1022, 1.0
    %v1024 = vrcp.pop %v1023
    %v1025 = vmul.f32 1.0, %v1024
    %v1026 = vtanh.pop %v1019
    %v1028 = vrot.slane %v870, 6
    %v1030 = vmul.f32 %v1025, %v1028
    %1032 = vrot.lane.b32.xlu0 %v1026, 98
    %v1033 = vpop.permute.xlu0 %1032
    %v1035 = vmul.f32 %v1025, %v1033
    %1037 = vrot.lane.b32.xlu0 %v1035, 10
    %v1038 = vpop.permute.xlu0 %1037
    %v1040 = vadd.f32 %v1030, %v1038
    %v1041 = vtanh.pop %v1040
    %1043 = vrot.lane.b32.xlu0 %v1041, 10
    %v1044 = vpop.permute.xlu0 %1043
    %v1046 = vmul.f32 %v1025, %v1044
    %1048 = vrot.lane.b32.xlu0 %v1040, 118
    %v1049 = vpop.permute.xlu0 %1048
    %vm1051 = vcmask 80902
    %1052 = vst.msk [vmem:[#allocation2 - $0x6] sm:$0xc0] %vm1051, %v1049
    %vm1053 = vcmask 1041408
    %v1054 = vsel %vm1053, %v526, %v706
    %v1055 = vsel %vm53, %v1054, %v876
    %vm1056 = vcmask 1045504
    %v1057 = vsel %vm1056, %v1055, %v1046
    %v1058 = vsel %vm1053, %v520, %v700
    %v1059 = vsel %vm53, %v1058, %v870
    %v1060 = vsel %vm1056, %v1059, %v1040
    %v1061 = vpack.c.bf16 %v1057, %v1057
    %v1062 = vunpack.c.l.bf16 %v1061
    %v1063 = vsub.f32 %v1057, %v1062
    %v1064 = vpack.c.bf16 %v1063, %v1063
    %1066 = vrot.lane.b32.xlu0 %v1061, 108
    %v1067 = vpop.permute.xlu0 %1066
    %v1069 = vrot.slane %v35, 3
    %v1071 = vsel %vm536, %v1067, 0
    %v1074 = vsel %vm540, %v1069, 0
    %1076 = vmatprep.subr.bf16.mxu0 0
    %1077 = vmatpush1.bf16.msra.mxu0 %v1074
    %1078 = vmatprep.subr.bf16.mxu0 0
    %1079 = vmatpush1.bf16.msra.mxu0 0
    %1080 = vmatprep.subr.bf16.mxu0 0
    %1081 = vmatpush1.bf16.msra.mxu0 0
    %1082 = vmatprep.subr.bf16.mxu0 0
    %1083 = vmatpush1.bf16.msra.mxu0 0
    %1084 = vmatprep.subr.bf16.mxu0 0
    %1085 = vmatpush1.bf16.msra.mxu0 0
    %1086 = vmatprep.subr.bf16.mxu0 0
    %1087 = vmatpush1.bf16.msra.mxu0 0
    %1088 = vmatprep.subr.bf16.mxu0 0
    %1089 = vmatpush1.bf16.msra.mxu0 0
    %1090 = vmatprep.subr.bf16.mxu0 0
    %1091 = vmatpush1.bf16.msra.mxu0 0
    %1092 = vmatprep.subr.bf16.mxu0 0
    %1093 = vmatpush1.bf16.msra.mxu0 0
    %1094 = vmatprep.subr.bf16.mxu0 0
    %1095 = vmatpush1.bf16.msra.mxu0 0
    %1096 = vmatprep.subr.bf16.mxu0 0
    %1097 = vmatpush1.bf16.msra.mxu0 0
    %1098 = vmatprep.subr.bf16.mxu0 0
    %1099 = vmatpush1.bf16.msra.mxu0 0
    %1100 = vmatprep.subr.bf16.mxu0 0
    %1101 = vmatpush1.bf16.msra.mxu0 0
    %1102 = vmatprep.subr.bf16.mxu0 0
    %1103 = vmatpush1.bf16.msra.mxu0 0
    %1104 = vmatprep.subr.bf16.mxu0 0
    %1105 = vmatpush1.bf16.msra.mxu0 0
    %1106 = vmatprep.subr.bf16.mxu0 0
    %1107 = vmatpush1.bf16.msra.mxu0 0
    %1108 = vmatprep.mubr.bf16.mxu0 0
    %1109 = vmatmul.mubr.bf16.gmra.mrb[0].mxu0 %v1071
    %v1110 = vpop.f32.mrb[0].mxu0
    %v1111 = vadd.f32 0.0, %v1110
    %v1112 = vpop.f32.mrb[0].mxu0
    %v1113 = vpop.f32.mrb[0].mxu0
    %v1114 = vpop.f32.mrb[0].mxu0
    %1115 = vdwg.mxu0
    %v1117 = vrot.slane %v30, 3
    %v1119 = vsel %vm540, %v1117, 0
    %1121 = vmatprep.subr.bf16.mxu0 0
    %1122 = vmatpush1.bf16.msra.mxu0 %v1119
    %1123 = vmatprep.subr.bf16.mxu0 0
    %1124 = vmatpush1.bf16.msra.mxu0 0
    %1125 = vmatprep.subr.bf16.mxu0 0
    %1126 = vmatpush1.bf16.msra.mxu0 0
    %1127 = vmatprep.subr.bf16.mxu0 0
    %1128 = vmatpush1.bf16.msra.mxu0 0
    %1129 = vmatprep.subr.bf16.mxu0 0
    %1130 = vmatpush1.bf16.msra.mxu0 0
    %1131 = vmatprep.subr.bf16.mxu0 0
    %1132 = vmatpush1.bf16.msra.mxu0 0
    %1133 = vmatprep.subr.bf16.mxu0 0
    %1134 = vmatpush1.bf16.msra.mxu0 0
    %1135 = vmatprep.subr.bf16.mxu0 0
    %1136 = vmatpush1.bf16.msra.mxu0 0
    %1137 = vmatprep.subr.bf16.mxu0 0
    %1138 = vmatpush1.bf16.msra.mxu0 0
    %1139 = vmatprep.subr.bf16.mxu0 0
    %1140 = vmatpush1.bf16.msra.mxu0 0
    %1141 = vmatprep.subr.bf16.mxu0 0
    %1142 = vmatpush1.bf16.msra.mxu0 0
    %1143 = vmatprep.subr.bf16.mxu0 0
    %1144 = vmatpush1.bf16.msra.mxu0 0
    %1145 = vmatprep.subr.bf16.mxu0 0
    %1146 = vmatpush1.bf16.msra.mxu0 0
    %1147 = vmatprep.subr.bf16.mxu0 0
    %1148 = vmatpush1.bf16.msra.mxu0 0
    %1149 = vmatprep.subr.bf16.mxu0 0
    %1150 = vmatpush1.bf16.msra.mxu0 0
    %1151 = vmatprep.subr.bf16.mxu0 0
    %1152 = vmatpush1.bf16.msra.mxu0 0
    %1153 = vmatprep.mubr.bf16.mxu0 0
    %1154 = vmatmul.mubr.bf16.gmra.mrb[0].mxu0 %v1071
    %v1155 = vpop.f32.mrb[0].mxu0
    %v1156 = vadd.f32 %v1111, %v1155
    %v1157 = vpop.f32.mrb[0].mxu0
    %v1158 = vpop.f32.mrb[0].mxu0
    %v1159 = vpop.f32.mrb[0].mxu0
    %1160 = vdwg.mxu0
    %1162 = vrot.lane.b32.xlu0 %v1064, 108
    %v1163 = vpop.permute.xlu0 %1162
    %v1165 = vsel %vm536, %v1163, 0
    %1167 = vmatprep.subr.bf16.mxu0 0
    %1168 = vmatpush1.bf16.msra.mxu0 %v1119
    %1169 = vmatprep.subr.bf16.mxu0 0
    %1170 = vmatpush1.bf16.msra.mxu0 0
    %1171 = vmatprep.subr.bf16.mxu0 0
    %1172 = vmatpush1.bf16.msra.mxu0 0
    %1173 = vmatprep.subr.bf16.mxu0 0
    %1174 = vmatpush1.bf16.msra.mxu0 0
    %1175 = vmatprep.subr.bf16.mxu0 0
    %1176 = vmatpush1.bf16.msra.mxu0 0
    %1177 = vmatprep.subr.bf16.mxu0 0
    %1178 = vmatpush1.bf16.msra.mxu0 0
    %1179 = vmatprep.subr.bf16.mxu0 0
    %1180 = vmatpush1.bf16.msra.mxu0 0
    %1181 = vmatprep.subr.bf16.mxu0 0
    %1182 = vmatpush1.bf16.msra.mxu0 0
    %1183 = vmatprep.subr.bf16.mxu0 0
    %1184 = vmatpush1.bf16.msra.mxu0 0
    %1185 = vmatprep.subr.bf16.mxu0 0
    %1186 = vmatpush1.bf16.msra.mxu0 0
    %1187 = vmatprep.subr.bf16.mxu0 0
    %1188 = vmatpush1.bf16.msra.mxu0 0
    %1189 = vmatprep.subr.bf16.mxu0 0
    %1190 = vmatpush1.bf16.msra.mxu0 0
    %1191 = vmatprep.subr.bf16.mxu0 0
    %1192 = vmatpush1.bf16.msra.mxu0 0
    %1193 = vmatprep.subr.bf16.mxu0 0
    %1194 = vmatpush1.bf16.msra.mxu0 0
    %1195 = vmatprep.subr.bf16.mxu0 0
    %1196 = vmatpush1.bf16.msra.mxu0 0
    %1197 = vmatprep.subr.bf16.mxu0 0
    %1198 = vmatpush1.bf16.msra.mxu0 0
    %1199 = vmatprep.mubr.bf16.mxu0 0
    %1200 = vmatmul.mubr.bf16.gmra.mrb[0].mxu0 %v1165
    %v1201 = vpop.f32.mrb[0].mxu0
    %v1202 = vadd.f32 0.0, %v1201
    %v1203 = vpop.f32.mrb[0].mxu0
    %v1204 = vpop.f32.mrb[0].mxu0
    %v1205 = vpop.f32.mrb[0].mxu0
    %1206 = vdwg.mxu0
    %v1207 = vadd.f32 %v1156, %v1202
    %v1208 = vadd.f32 %v1207, %v39
    %v1209 = vxor.u32 %v1208, 2147483648
    %v1210 = vmul.f32 %v1209, 1.442695
    %v1211 = vpow.pop %v1210
    %v1212 = vadd.f32 %v1211, 1.0
    %v1213 = vrcp.pop %v1212
    %v1214 = vmul.f32 1.0, %v1213
    %v1215 = vtanh.pop %v1208
    %v1216 = vmul.f32 %v1214, %v1060
    %1218 = vrot.lane.b32.xlu0 %v1215, 98
    %v1219 = vpop.permute.xlu0 %1218
    %v1221 = vmul.f32 %v1214, %v1219
    %1223 = vrot.lane.b32.xlu0 %v1221, 10
    %v1224 = vpop.permute.xlu0 %1223
    %v1226 = vadd.f32 %v1216, %v1224
    %v1227 = vtanh.pop %v1226
    %1229 = vrot.lane.b32.xlu0 %v1227, 10
    %v1230 = vpop.permute.xlu0 %1229
    %v1232 = vmul.f32 %v1214, %v1230
    %v1233 = vpack.c.bf16 %v1232, %v1232
    %v1234 = vunpack.c.l.bf16 %v1233
    %v1235 = vsub.f32 %v1232, %v1234
    %v1236 = vpack.c.bf16 %v1235, %v1235
    %1238 = vrot.lane.b32.xlu0 %v1233, 108
    %v1239 = vpop.permute.xlu0 %1238
    %v1241 = vsel %vm536, %v1239, 0
    %1243 = vmatprep.subr.bf16.mxu0 0
    %1244 = vmatpush1.bf16.msra.mxu0 %v1074
    %1245 = vmatprep.subr.bf16.mxu0 0
    %1246 = vmatpush1.bf16.msra.mxu0 0
    %1247 = vmatprep.subr.bf16.mxu0 0
    %1248 = vmatpush1.bf16.msra.mxu0 0
    %1249 = vmatprep.subr.bf16.mxu0 0
    %1250 = vmatpush1.bf16.msra.mxu0 0
    %1251 = vmatprep.subr.bf16.mxu0 0
    %1252 = vmatpush1.bf16.msra.mxu0 0
    %1253 = vmatprep.subr.bf16.mxu0 0
    %1254 = vmatpush1.bf16.msra.mxu0 0
    %1255 = vmatprep.subr.bf16.mxu0 0
    %1256 = vmatpush1.bf16.msra.mxu0 0
    %1257 = vmatprep.subr.bf16.mxu0 0
    %1258 = vmatpush1.bf16.msra.mxu0 0
    %1259 = vmatprep.subr.bf16.mxu0 0
    %1260 = vmatpush1.bf16.msra.mxu0 0
    %1261 = vmatprep.subr.bf16.mxu0 0
    %1262 = vmatpush1.bf16.msra.mxu0 0
    %1263 = vmatprep.subr.bf16.mxu0 0
    %1264 = vmatpush1.bf16.msra.mxu0 0
    %1265 = vmatprep.subr.bf16.mxu0 0
    %1266 = vmatpush1.bf16.msra.mxu0 0
    %1267 = vmatprep.subr.bf16.mxu0 0
    %1268 = vmatpush1.bf16.msra.mxu0 0
    %1269 = vmatprep.subr.bf16.mxu0 0
    %1270 = vmatpush1.bf16.msra.mxu0 0
    %1271 = vmatprep.subr.bf16.mxu0 0
    %1272 = vmatpush1.bf16.msra.mxu0 0
    %1273 = vmatprep.subr.bf16.mxu0 0
    %1274 = vmatpush1.bf16.msra.mxu0 0
    %1275 = vmatprep.mubr.bf16.mxu0 0
    %1276 = vmatmul.mubr.bf16.gmra.mrb[0].mxu0 %v1241
    %v1277 = vpop.f32.mrb[0].mxu0
    %v1278 = vadd.f32 0.0, %v1277
    %v1279 = vpop.f32.mrb[0].mxu0
    %v1280 = vpop.f32.mrb[0].mxu0
    %v1281 = vpop.f32.mrb[0].mxu0
    %1282 = vdwg.mxu0
    %1283 = vmatprep.subr.bf16.mxu0 0
    %1284 = vmatpush1.bf16.msra.mxu0 %v1119
    %1285 = vmatprep.subr.bf16.mxu0 0
    %1286 = vmatpush1.bf16.msra.mxu0 0
    %1287 = vmatprep.subr.bf16.mxu0 0
    %1288 = vmatpush1.bf16.msra.mxu0 0
    %1289 = vmatprep.subr.bf16.mxu0 0
    %1290 = vmatpush1.bf16.msra.mxu0 0
    %1291 = vmatprep.subr.bf16.mxu0 0
    %1292 = vmatpush1.bf16.msra.mxu0 0
    %1293 = vmatprep.subr.bf16.mxu0 0
    %1294 = vmatpush1.bf16.msra.mxu0 0
    %1295 = vmatprep.subr.bf16.mxu0 0
    %1296 = vmatpush1.bf16.msra.mxu0 0
    %1297 = vmatprep.subr.bf16.mxu0 0
    %1298 = vmatpush1.bf16.msra.mxu0 0
    %1299 = vmatprep.subr.bf16.mxu0 0
    %1300 = vmatpush1.bf16.msra.mxu0 0
    %1301 = vmatprep.subr.bf16.mxu0 0
    %1302 = vmatpush1.bf16.msra.mxu0 0
    %1303 = vmatprep.subr.bf16.mxu0 0
    %1304 = vmatpush1.bf16.msra.mxu0 0
    %1305 = vmatprep.subr.bf16.mxu0 0
    %1306 = vmatpush1.bf16.msra.mxu0 0
    %1307 = vmatprep.subr.bf16.mxu0 0
    %1308 = vmatpush1.bf16.msra.mxu0 0
    %1309 = vmatprep.subr.bf16.mxu0 0
    %1310 = vmatpush1.bf16.msra.mxu0 0
    %1311 = vmatprep.subr.bf16.mxu0 0
    %1312 = vmatpush1.bf16.msra.mxu0 0
    %1313 = vmatprep.subr.bf16.mxu0 0
    %1314 = vmatpush1.bf16.msra.mxu0 0
    %1315 = vmatprep.mubr.bf16.mxu0 0
    %1316 = vmatmul.mubr.bf16.gmra.mrb[0].mxu0 %v1241
    %v1317 = vpop.f32.mrb[0].mxu0
    %v1318 = vadd.f32 %v1278, %v1317
    %v1319 = vpop.f32.mrb[0].mxu0
    %v1320 = vpop.f32.mrb[0].mxu0
    %v1321 = vpop.f32.mrb[0].mxu0
    %1322 = vdwg.mxu0
    %1324 = vrot.lane.b32.xlu0 %v1236, 108
    %v1325 = vpop.permute.xlu0 %1324
    %v1327 = vsel %vm536, %v1325, 0
    %1329 = vmatprep.subr.bf16.mxu0 0
    %1330 = vmatpush1.bf16.msra.mxu0 %v1119
    %1331 = vmatprep.subr.bf16.mxu0 0
    %1332 = vmatpush1.bf16.msra.mxu0 0
    %1333 = vmatprep.subr.bf16.mxu0 0
    %1334 = vmatpush1.bf16.msra.mxu0 0
    %1335 = vmatprep.subr.bf16.mxu0 0
    %1336 = vmatpush1.bf16.msra.mxu0 0
    %1337 = vmatprep.subr.bf16.mxu0 0
    %1338 = vmatpush1.bf16.msra.mxu0 0
    %1339 = vmatprep.subr.bf16.mxu0 0
    %1340 = vmatpush1.bf16.msra.mxu0 0
    %1341 = vmatprep.subr.bf16.mxu0 0
    %1342 = vmatpush1.bf16.msra.mxu0 0
    %1343 = vmatprep.subr.bf16.mxu0 0
    %1344 = vmatpush1.bf16.msra.mxu0 0
    %1345 = vmatprep.subr.bf16.mxu0 0
    %1346 = vmatpush1.bf16.msra.mxu0 0
    %1347 = vmatprep.subr.bf16.mxu0 0
    %1348 = vmatpush1.bf16.msra.mxu0 0
    %1349 = vmatprep.subr.bf16.mxu0 0
    %1350 = vmatpush1.bf16.msra.mxu0 0
    %1351 = vmatprep.subr.bf16.mxu0 0
    %1352 = vmatpush1.bf16.msra.mxu0 0
    %1353 = vmatprep.subr.bf16.mxu0 0
    %1354 = vmatpush1.bf16.msra.mxu0 0
    %1355 = vmatprep.subr.bf16.mxu0 0
    %1356 = vmatpush1.bf16.msra.mxu0 0
    %1357 = vmatprep.subr.bf16.mxu0 0
    %1358 = vmatpush1.bf16.msra.mxu0 0
    %1359 = vmatprep.subr.bf16.mxu0 0
    %1360 = vmatpush1.bf16.msra.mxu0 0
    %1361 = vmatprep.mubr.bf16.mxu0 0
    %1362 = vmatmul.mubr.bf16.gmra.mrb[0].mxu0 %v1327
    %v1363 = vpop.f32.mrb[0].mxu0
    %v1364 = vadd.f32 0.0, %v1363
    %v1365 = vpop.f32.mrb[0].mxu0
    %v1366 = vpop.f32.mrb[0].mxu0
    %v1367 = vpop.f32.mrb[0].mxu0
    %1368 = vdwg.mxu0
    %v1369 = vadd.f32 %v1318, %v1364
    %v1370 = vadd.f32 %v1369, %v39
    %v1371 = vxor.u32 %v1370, 2147483648
    %v1372 = vmul.f32 %v1371, 1.442695
    %v1373 = vpow.pop %v1372
    %v1374 = vadd.f32 %v1373, 1.0
    %v1375 = vrcp.pop %v1374
    %v1376 = vmul.f32 1.0, %v1375
    %v1377 = vtanh.pop %v1370
    %v1378 = vmul.f32 %v1376, %v1226
    %1380 = vrot.lane.b32.xlu0 %v1377, 98
    %v1381 = vpop.permute.xlu0 %1380
    %v1383 = vmul.f32 %v1376, %v1381
    %1385 = vrot.lane.b32.xlu0 %v1383, 10
    %v1386 = vpop.permute.xlu0 %1385
    %v1388 = vadd.f32 %v1378, %v1386
    %v1389 = vtanh.pop %v1388
    %1391 = vrot.lane.b32.xlu0 %v1389, 10
    %v1392 = vpop.permute.xlu0 %1391
    %v1394 = vmul.f32 %v1376, %v1392
    %v1395 = vpack.c.bf16 %v1394, %v1394
    %v1396 = vunpack.c.l.bf16 %v1395
    %v1397 = vsub.f32 %v1394, %v1396
    %v1398 = vpack.c.bf16 %v1397, %v1397
    %1400 = vrot.lane.b32.xlu0 %v1395, 108
    %v1401 = vpop.permute.xlu0 %1400
    %v1403 = vsel %vm536, %v1401, 0
    %1405 = vmatprep.subr.bf16.mxu0 0
    %1406 = vmatpush1.bf16.msra.mxu0 %v1074
    %1407 = vmatprep.subr.bf16.mxu0 0
    %1408 = vmatpush1.bf16.msra.mxu0 0
    %1409 = vmatprep.subr.bf16.mxu0 0
    %1410 = vmatpush1.bf16.msra.mxu0 0
    %1411 = vmatprep.subr.bf16.mxu0 0
    %1412 = vmatpush1.bf16.msra.mxu0 0
    %1413 = vmatprep.subr.bf16.mxu0 0
    %1414 = vmatpush1.bf16.msra.mxu0 0
    %1415 = vmatprep.subr.bf16.mxu0 0
    %1416 = vmatpush1.bf16.msra.mxu0 0
    %1417 = vmatprep.subr.bf16.mxu0 0
    %1418 = vmatpush1.bf16.msra.mxu0 0
    %1419 = vmatprep.subr.bf16.mxu0 0
    %1420 = vmatpush1.bf16.msra.mxu0 0
    %1421 = vmatprep.subr.bf16.mxu0 0
    %1422 = vmatpush1.bf16.msra.mxu0 0
    %1423 = vmatprep.subr.bf16.mxu0 0
    %1424 = vmatpush1.bf16.msra.mxu0 0
    %1425 = vmatprep.subr.bf16.mxu0 0
    %1426 = vmatpush1.bf16.msra.mxu0 0
    %1427 = vmatprep.subr.bf16.mxu0 0
    %1428 = vmatpush1.bf16.msra.mxu0 0
    %1429 = vmatprep.subr.bf16.mxu0 0
    %1430 = vmatpush1.bf16.msra.mxu0 0
    %1431 = vmatprep.subr.bf16.mxu0 0
    %1432 = vmatpush1.bf16.msra.mxu0 0
    %1433 = vmatprep.subr.bf16.mxu0 0
    %1434 = vmatpush1.bf16.msra.mxu0 0
    %1435 = vmatprep.subr.bf16.mxu0 0
    %1436 = vmatpush1.bf16.msra.mxu0 0
    %1437 = vmatprep.mubr.bf16.mxu0 0
    %1438 = vmatmul.mubr.bf16.gmra.mrb[0].mxu0 %v1403
    %v1439 = vpop.f32.mrb[0].mxu0
    %v1440 = vadd.f32 0.0, %v1439
    %v1441 = vpop.f32.mrb[0].mxu0
    %v1442 = vpop.f32.mrb[0].mxu0
    %v1443 = vpop.f32.mrb[0].mxu0
    %1444 = vdwg.mxu0
    %1445 = vmatprep.subr.bf16.mxu0 0
    %1446 = vmatpush1.bf16.msra.mxu0 %v1119
    %1447 = vmatprep.subr.bf16.mxu0 0
    %1448 = vmatpush1.bf16.msra.mxu0 0
    %1449 = vmatprep.subr.bf16.mxu0 0
    %1450 = vmatpush1.bf16.msra.mxu0 0
    %1451 = vmatprep.subr.bf16.mxu0 0
    %1452 = vmatpush1.bf16.msra.mxu0 0
    %1453 = vmatprep.subr.bf16.mxu0 0
    %1454 = vmatpush1.bf16.msra.mxu0 0
    %1455 = vmatprep.subr.bf16.mxu0 0
    %1456 = vmatpush1.bf16.msra.mxu0 0
    %1457 = vmatprep.subr.bf16.mxu0 0
    %1458 = vmatpush1.bf16.msra.mxu0 0
    %1459 = vmatprep.subr.bf16.mxu0 0
    %1460 = vmatpush1.bf16.msra.mxu0 0
    %1461 = vmatprep.subr.bf16.mxu0 0
    %1462 = vmatpush1.bf16.msra.mxu0 0
    %1463 = vmatprep.subr.bf16.mxu0 0
    %1464 = vmatpush1.bf16.msra.mxu0 0
    %1465 = vmatprep.subr.bf16.mxu0 0
    %1466 = vmatpush1.bf16.msra.mxu0 0
    %1467 = vmatprep.subr.bf16.mxu0 0
    %1468 = vmatpush1.bf16.msra.mxu0 0
    %1469 = vmatprep.subr.bf16.mxu0 0
    %1470 = vmatpush1.bf16.msra.mxu0 0
    %1471 = vmatprep.subr.bf16.mxu0 0
    %1472 = vmatpush1.bf16.msra.mxu0 0
    %1473 = vmatprep.subr.bf16.mxu0 0
    %1474 = vmatpush1.bf16.msra.mxu0 0
    %1475 = vmatprep.subr.bf16.mxu0 0
    %1476 = vmatpush1.bf16.msra.mxu0 0
    %1477 = vmatprep.mubr.bf16.mxu0 0
    %1478 = vmatmul.mubr.bf16.gmra.mrb[0].mxu0 %v1403
    %v1479 = vpop.f32.mrb[0].mxu0
    %v1480 = vadd.f32 %v1440, %v1479
    %v1481 = vpop.f32.mrb[0].mxu0
    %v1482 = vpop.f32.mrb[0].mxu0
    %v1483 = vpop.f32.mrb[0].mxu0
    %1484 = vdwg.mxu0
    %1486 = vrot.lane.b32.xlu0 %v1398, 108
    %v1487 = vpop.permute.xlu0 %1486
    %v1489 = vsel %vm536, %v1487, 0
    %1491 = vmatprep.subr.bf16.mxu0 0
    %1492 = vmatpush1.bf16.msra.mxu0 %v1119
    %1493 = vmatprep.subr.bf16.mxu0 0
    %1494 = vmatpush1.bf16.msra.mxu0 0
    %1495 = vmatprep.subr.bf16.mxu0 0
    %1496 = vmatpush1.bf16.msra.mxu0 0
    %1497 = vmatprep.subr.bf16.mxu0 0
    %1498 = vmatpush1.bf16.msra.mxu0 0
    %1499 = vmatprep.subr.bf16.mxu0 0
    %1500 = vmatpush1.bf16.msra.mxu0 0
    %1501 = vmatprep.subr.bf16.mxu0 0
    %1502 = vmatpush1.bf16.msra.mxu0 0
    %1503 = vmatprep.subr.bf16.mxu0 0
    %1504 = vmatpush1.bf16.msra.mxu0 0
    %1505 = vmatprep.subr.bf16.mxu0 0
    %1506 = vmatpush1.bf16.msra.mxu0 0
    %1507 = vmatprep.subr.bf16.mxu0 0
    %1508 = vmatpush1.bf16.msra.mxu0 0
    %1509 = vmatprep.subr.bf16.mxu0 0
    %1510 = vmatpush1.bf16.msra.mxu0 0
    %1511 = vmatprep.subr.bf16.mxu0 0
    %1512 = vmatpush1.bf16.msra.mxu0 0
    %1513 = vmatprep.subr.bf16.mxu0 0
    %1514 = vmatpush1.bf16.msra.mxu0 0
    %1515 = vmatprep.subr.bf16.mxu0 0
    %1516 = vmatpush1.bf16.msra.mxu0 0
    %1517 = vmatprep.subr.bf16.mxu0 0
    %1518 = vmatpush1.bf16.msra.mxu0 0
    %1519 = vmatprep.subr.bf16.mxu0 0
    %1520 = vmatpush1.bf16.msra.mxu0 0
    %1521 = vmatprep.subr.bf16.mxu0 0
    %1522 = vmatpush1.bf16.msra.mxu0 0
    %1523 = vmatprep.mubr.bf16.mxu0 0
    %1524 = vmatmul.mubr.bf16.gmra.mrb[0].mxu0 %v1489
    %v1525 = vpop.f32.mrb[0].mxu0
    %v1526 = vadd.f32 0.0, %v1525
    %v1527 = vpop.f32.mrb[0].mxu0
    %v1528 = vpop.f32.mrb[0].mxu0
    %v1529 = vpop.f32.mrb[0].mxu0
    %1530 = vdwg.mxu0
    %v1531 = vadd.f32 %v1480, %v1526
    %v1532 = vadd.f32 %v1531, %v39
    %v1533 = vxor.u32 %v1532, 2147483648
    %v1534 = vmul.f32 %v1533, 1.442695
    %v1535 = vpow.pop %v1534
    %v1536 = vadd.f32 %v1535, 1.0
    %v1537 = vrcp.pop %v1536
    %v1538 = vmul.f32 1.0, %v1537
    %v1539 = vtanh.pop %v1532
    %v1540 = vmul.f32 %v1538, %v1388
    %1542 = vrot.lane.b32.xlu0 %v1539, 98
    %v1543 = vpop.permute.xlu0 %1542
    %v1545 = vmul.f32 %v1538, %v1543
    %1547 = vrot.lane.b32.xlu0 %v1545, 10
    %v1548 = vpop.permute.xlu0 %1547
    %v1550 = vadd.f32 %v1540, %v1548
    %v1551 = vtanh.pop %v1550
    %1553 = vrot.lane.b32.xlu0 %v1551, 10
    %v1554 = vpop.permute.xlu0 %1553
    %v1556 = vmul.f32 %v1538, %v1554
    %v1557 = vpack.c.bf16 %v1556, %v1556
    %v1558 = vunpack.c.l.bf16 %v1557
    %v1559 = vsub.f32 %v1556, %v1558
    %v1560 = vpack.c.bf16 %v1559, %v1559
    %1562 = vrot.lane.b32.xlu0 %v1557, 108
    %v1563 = vpop.permute.xlu0 %1562
    %v1565 = vsel %vm536, %v1563, 0
    %1567 = vmatprep.subr.bf16.mxu0 0
    %1568 = vmatpush1.bf16.msra.mxu0 %v1074
    %1569 = vmatprep.subr.bf16.mxu0 0
    %1570 = vmatpush1.bf16.msra.mxu0 0
    %1571 = vmatprep.subr.bf16.mxu0 0
    %1572 = vmatpush1.bf16.msra.mxu0 0
    %1573 = vmatprep.subr.bf16.mxu0 0
    %1574 = vmatpush1.bf16.msra.mxu0 0
    %1575 = vmatprep.subr.bf16.mxu0 0
    %1576 = vmatpush1.bf16.msra.mxu0 0
    %1577 = vmatprep.subr.bf16.mxu0 0
    %1578 = vmatpush1.bf16.msra.mxu0 0
    %1579 = vmatprep.subr.bf16.mxu0 0
    %1580 = vmatpush1.bf16.msra.mxu0 0
    %1581 = vmatprep.subr.bf16.mxu0 0
    %1582 = vmatpush1.bf16.msra.mxu0 0
    %1583 = vmatprep.subr.bf16.mxu0 0
    %1584 = vmatpush1.bf16.msra.mxu0 0
    %1585 = vmatprep.subr.bf16.mxu0 0
    %1586 = vmatpush1.bf16.msra.mxu0 0
    %1587 = vmatprep.subr.bf16.mxu0 0
    %1588 = vmatpush1.bf16.msra.mxu0 0
    %1589 = vmatprep.subr.bf16.mxu0 0
    %1590 = vmatpush1.bf16.msra.mxu0 0
    %1591 = vmatprep.subr.bf16.mxu0 0
    %1592 = vmatpush1.bf16.msra.mxu0 0
    %1593 = vmatprep.subr.bf16.mxu0 0
    %1594 = vmatpush1.bf16.msra.mxu0 0
    %1595 = vmatprep.subr.bf16.mxu0 0
    %1596 = vmatpush1.bf16.msra.mxu0 0
    %1597 = vmatprep.subr.bf16.mxu0 0
    %1598 = vmatpush1.bf16.msra.mxu0 0
    %1599 = vmatprep.mubr.bf16.mxu0 0
    %1600 = vmatmul.mubr.bf16.gmra.mrb[0].mxu0 %v1565
    %v1601 = vpop.f32.mrb[0].mxu0
    %v1602 = vadd.f32 0.0, %v1601
    %v1603 = vpop.f32.mrb[0].mxu0
    %v1604 = vpop.f32.mrb[0].mxu0
    %v1605 = vpop.f32.mrb[0].mxu0
    %1606 = vdwg.mxu0
    %1607 = vmatprep.subr.bf16.mxu0 0
    %1608 = vmatpush1.bf16.msra.mxu0 %v1119
    %1609 = vmatprep.subr.bf16.mxu0 0
    %1610 = vmatpush1.bf16.msra.mxu0 0
    %1611 = vmatprep.subr.bf16.mxu0 0
    %1612 = vmatpush1.bf16.msra.mxu0 0
    %1613 = vmatprep.subr.bf16.mxu0 0
    %1614 = vmatpush1.bf16.msra.mxu0 0
    %1615 = vmatprep.subr.bf16.mxu0 0
    %1616 = vmatpush1.bf16.msra.mxu0 0
    %1617 = vmatprep.subr.bf16.mxu0 0
    %1618 = vmatpush1.bf16.msra.mxu0 0
    %1619 = vmatprep.subr.bf16.mxu0 0
    %1620 = vmatpush1.bf16.msra.mxu0 0
    %1621 = vmatprep.subr.bf16.mxu0 0
    %1622 = vmatpush1.bf16.msra.mxu0 0
    %1623 = vmatprep.subr.bf16.mxu0 0
    %1624 = vmatpush1.bf16.msra.mxu0 0
    %1625 = vmatprep.subr.bf16.mxu0 0
    %1626 = vmatpush1.bf16.msra.mxu0 0
    %1627 = vmatprep.subr.bf16.mxu0 0
    %1628 = vmatpush1.bf16.msra.mxu0 0
    %1629 = vmatprep.subr.bf16.mxu0 0
    %1630 = vmatpush1.bf16.msra.mxu0 0
    %1631 = vmatprep.subr.bf16.mxu0 0
    %1632 = vmatpush1.bf16.msra.mxu0 0
    %1633 = vmatprep.subr.bf16.mxu0 0
    %1634 = vmatpush1.bf16.msra.mxu0 0
    %1635 = vmatprep.subr.bf16.mxu0 0
    %1636 = vmatpush1.bf16.msra.mxu0 0
    %1637 = vmatprep.subr.bf16.mxu0 0
    %1638 = vmatpush1.bf16.msra.mxu0 0
    %1639 = vmatprep.mubr.bf16.mxu0 0
    %1640 = vmatmul.mubr.bf16.gmra.mrb[0].mxu0 %v1565
    %v1641 = vpop.f32.mrb[0].mxu0
    %v1642 = vadd.f32 %v1602, %v1641
    %v1643 = vpop.f32.mrb[0].mxu0
    %v1644 = vpop.f32.mrb[0].mxu0
    %v1645 = vpop.f32.mrb[0].mxu0
    %1646 = vdwg.mxu0
    %1648 = vrot.lane.b32.xlu0 %v1560, 108
    %v1649 = vpop.permute.xlu0 %1648
    %v1651 = vsel %vm536, %v1649, 0
    %1653 = vmatprep.subr.bf16.mxu0 0
    %1654 = vmatpush1.bf16.msra.mxu0 %v1119
    %1655 = vmatprep.subr.bf16.mxu0 0
    %1656 = vmatpush1.bf16.msra.mxu0 0
    %1657 = vmatprep.subr.bf16.mxu0 0
    %1658 = vmatpush1.bf16.msra.mxu0 0
    %1659 = vmatprep.subr.bf16.mxu0 0
    %1660 = vmatpush1.bf16.msra.mxu0 0
    %1661 = vmatprep.subr.bf16.mxu0 0
    %1662 = vmatpush1.bf16.msra.mxu0 0
    %1663 = vmatprep.subr.bf16.mxu0 0
    %1664 = vmatpush1.bf16.msra.mxu0 0
    %1665 = vmatprep.subr.bf16.mxu0 0
    %1666 = vmatpush1.bf16.msra.mxu0 0
    %1667 = vmatprep.subr.bf16.mxu0 0
    %1668 = vmatpush1.bf16.msra.mxu0 0
    %1669 = vmatprep.subr.bf16.mxu0 0
    %1670 = vmatpush1.bf16.msra.mxu0 0
    %1671 = vmatprep.subr.bf16.mxu0 0
    %1672 = vmatpush1.bf16.msra.mxu0 0
    %1673 = vmatprep.subr.bf16.mxu0 0
    %1674 = vmatpush1.bf16.msra.mxu0 0
    %1675 = vmatprep.subr.bf16.mxu0 0
    %1676 = vmatpush1.bf16.msra.mxu0 0
    %1677 = vmatprep.subr.bf16.mxu0 0
    %1678 = vmatpush1.bf16.msra.mxu0 0
    %1679 = vmatprep.subr.bf16.mxu0 0
    %1680 = vmatpush1.bf16.msra.mxu0 0
    %1681 = vmatprep.subr.bf16.mxu0 0
    %1682 = vmatpush1.bf16.msra.mxu0 0
    %1683 = vmatprep.subr.bf16.mxu0 0
    %1684 = vmatpush1.bf16.msra.mxu0 0
    %1685 = vmatprep.mubr.bf16.mxu0 0
    %1686 = vmatmul.mubr.bf16.gmra.mrb[0].mxu0 %v1651
    %v1687 = vpop.f32.mrb[0].mxu0
    %v1688 = vadd.f32 0.0, %v1687
    %v1689 = vpop.f32.mrb[0].mxu0
    %v1690 = vpop.f32.mrb[0].mxu0
    %v1691 = vpop.f32.mrb[0].mxu0
    %1692 = vdwg.mxu0
    %v1693 = vadd.f32 %v1642, %v1688
    %v1694 = vadd.f32 %v1693, %v39
    %v1695 = vxor.u32 %v1694, 2147483648
    %v1696 = vmul.f32 %v1695, 1.442695
    %v1697 = vpow.pop %v1696
    %v1698 = vadd.f32 %v1697, 1.0
    %v1699 = vrcp.pop %v1698
    %v1700 = vmul.f32 1.0, %v1699
    %v1701 = vtanh.pop %v1694
    %v1702 = vmul.f32 %v1700, %v1550
    %1704 = vrot.lane.b32.xlu0 %v1701, 98
    %v1705 = vpop.permute.xlu0 %1704
    %v1707 = vmul.f32 %v1700, %v1705
    %1709 = vrot.lane.b32.xlu0 %v1707, 10
    %v1710 = vpop.permute.xlu0 %1709
    %v1712 = vadd.f32 %v1702, %v1710
    %v1713 = vtanh.pop %v1712
    %1715 = vrot.lane.b32.xlu0 %v1713, 10
    %v1716 = vpop.permute.xlu0 %1715
    %v1718 = vmul.f32 %v1700, %v1716
    %1724 = vrot.lane.b32.xlu0 %v1057, 108
    %v1725 = vpop.permute.xlu0 %1724
    %1726 = vrot.lane.b32.xlu0 %v1232, 108
    %v1727 = vpop.permute.xlu0 %1726
    %1728 = vrot.lane.b32.xlu0 %v1394, 108
    %v1729 = vpop.permute.xlu0 %1728
    %1730 = vrot.lane.b32.xlu0 %v1556, 108
    %v1731 = vpop.permute.xlu0 %1730
    %1732 = vrot.lane.b32.xlu0 %v1718, 108
    %v1733 = vpop.permute.xlu0 %1732
    %v1734 = vsel %vm536, %v1725, 0
    %v1736 = vsel %vm536, %v1727, 0
    %v1738 = vsel %vm536, %v1729, 0
    %v1740 = vsel %vm536, %v1731, 0
    %v1742 = vsel %vm536, %v1733, 0
    %v1745 = vsel %vm1053, %v23, 0
    %1747 = vmatprep.subr.mxu0 0.0
    %v1748 = vand.u32 %v22, 4294901760
    %1749 = vmatpush1.msra.mxu0 %v1748
    %1750 = vmatprep.subr.mxu0 0.0
    %v1751 = vand.u32 %v1745, 4294901760
    %1752 = vmatpush1.msra.mxu0 %v1751
    %1753 = vmatprep.subr.mxu0 0.0
    %1754 = vmatpush1.msra.mxu0 0.0
    %1755 = vmatprep.subr.mxu0 0.0
    %1756 = vmatpush1.msra.mxu0 0.0
    %1757 = vmatprep.subr.mxu0 0.0
    %1758 = vmatpush1.msra.mxu0 0.0
    %1759 = vmatprep.subr.mxu0 0.0
    %1760 = vmatpush1.msra.mxu0 0.0
    %1761 = vmatprep.subr.mxu0 0.0
    %1762 = vmatpush1.msra.mxu0 0.0
    %1763 = vmatprep.subr.mxu0 0.0
    %1764 = vmatpush1.msra.mxu0 0.0
    %1765 = vmatprep.subr.mxu0 0.0
    %1766 = vmatpush1.msra.mxu0 0.0
    %1767 = vmatprep.subr.mxu0 0.0
    %1768 = vmatpush1.msra.mxu0 0.0
    %1769 = vmatprep.subr.mxu0 0.0
    %1770 = vmatpush1.msra.mxu0 0.0
    %1771 = vmatprep.subr.mxu0 0.0
    %1772 = vmatpush1.msra.mxu0 0.0
    %1773 = vmatprep.subr.mxu0 0.0
    %1774 = vmatpush1.msra.mxu0 0.0
    %1775 = vmatprep.subr.mxu0 0.0
    %1776 = vmatpush1.msra.mxu0 0.0
    %1777 = vmatprep.subr.mxu0 0.0
    %1778 = vmatpush1.msra.mxu0 0.0
    %1779 = vmatprep.subr.mxu0 0.0
    %1780 = vmatpush1.msra.mxu0 0.0
    %1781 = vmatprep.subr.mxu0 0.0
    %1782 = vmatpush1.msra.mxu0 0.0
    %1783 = vmatprep.subr.mxu0 0.0
    %1784 = vmatpush1.msra.mxu0 0.0
    %1785 = vmatprep.subr.mxu0 0.0
    %1786 = vmatpush1.msra.mxu0 0.0
    %1787 = vmatprep.subr.mxu0 0.0
    %1788 = vmatpush1.msra.mxu0 0.0
    %1789 = vmatprep.subr.mxu0 0.0
    %1790 = vmatpush1.msra.mxu0 0.0
    %1791 = vmatprep.subr.mxu0 0.0
    %1792 = vmatpush1.msra.mxu0 0.0
    %1793 = vmatprep.subr.mxu0 0.0
    %1794 = vmatpush1.msra.mxu0 0.0
    %1795 = vmatprep.subr.mxu0 0.0
    %1796 = vmatpush1.msra.mxu0 0.0
    %1797 = vmatprep.subr.mxu0 0.0
    %1798 = vmatpush1.msra.mxu0 0.0
    %1799 = vmatprep.subr.mxu0 0.0
    %1800 = vmatpush1.msra.mxu0 0.0
    %1801 = vmatprep.subr.mxu0 0.0
    %1802 = vmatpush1.msra.mxu0 0.0
    %1803 = vmatprep.subr.mxu0 0.0
    %1804 = vmatpush1.msra.mxu0 0.0
    %1805 = vmatprep.subr.mxu0 0.0
    %1806 = vmatpush1.msra.mxu0 0.0
    %1807 = vmatprep.subr.mxu0 0.0
    %1808 = vmatpush1.msra.mxu0 0.0
    %1809 = vmatprep.subr.mxu0 0.0
    %1810 = vmatpush1.msra.mxu0 0.0
    %1811 = vmatprep.subr.mxu0 0.0
    %1812 = vmatpush1.msra.mxu0 0.0
    %1813 = vmatprep.mubr.f32.mxu0 0.0
    %v1814 = vand.u32 %v1734, 4294901760
    %v1815 = vsub.f32 %v1734, %v1814
    %v1816 = vand.u32 %v1815, 4294901760
    %v1817 = vsub.f32 %v1815, %v1816
    %v1818 = vand.u32 %v1817, 4294901760
    %1819 = vmatmul.mubr.f32.gmra.mrb[0].mxu0 %v1818
    %v1820 = vpop.f32.mrb[0].mxu0
    %v1821 = vadd.f32 %v43, %v1820
    %v1822 = vpop.f32.mrb[0].mxu0
    %1823 = vmatprep.mubr.f32.mxu0 0.0
    %v1824 = vand.u32 %v1736, 4294901760
    %v1825 = vsub.f32 %v1736, %v1824
    %v1826 = vand.u32 %v1825, 4294901760
    %v1827 = vsub.f32 %v1825, %v1826
    %v1828 = vand.u32 %v1827, 4294901760
    %1829 = vmatmul.mubr.f32.gmra.mrb[0].mxu0 %v1828
    %v1830 = vpop.f32.mrb[0].mxu0
    %v1831 = vadd.f32 %v43, %v1830
    %v1832 = vpop.f32.mrb[0].mxu0
    %1833 = vmatprep.mubr.f32.mxu0 0.0
    %v1834 = vand.u32 %v1738, 4294901760
    %v1835 = vsub.f32 %v1738, %v1834
    %v1836 = vand.u32 %v1835, 4294901760
    %v1837 = vsub.f32 %v1835, %v1836
    %v1838 = vand.u32 %v1837, 4294901760
    %1839 = vmatmul.mubr.f32.gmra.mrb[0].mxu0 %v1838
    %v1840 = vpop.f32.mrb[0].mxu0
    %v1841 = vadd.f32 %v43, %v1840
    %v1842 = vpop.f32.mrb[0].mxu0
    %1843 = vmatprep.mubr.f32.mxu0 0.0
    %v1844 = vand.u32 %v1740, 4294901760
    %v1845 = vsub.f32 %v1740, %v1844
    %v1846 = vand.u32 %v1845, 4294901760
    %v1847 = vsub.f32 %v1845, %v1846
    %v1848 = vand.u32 %v1847, 4294901760
    %1849 = vmatmul.mubr.f32.gmra.mrb[0].mxu0 %v1848
    %v1850 = vpop.f32.mrb[0].mxu0
    %v1851 = vadd.f32 %v43, %v1850
    %v1852 = vpop.f32.mrb[0].mxu0
    %1853 = vmatprep.mubr.f32.mxu0 0.0
    %v1854 = vand.u32 %v1742, 4294901760
    %v1855 = vsub.f32 %v1742, %v1854
    %v1856 = vand.u32 %v1855, 4294901760
    %v1857 = vsub.f32 %v1855, %v1856
    %v1858 = vand.u32 %v1857, 4294901760
    %1859 = vmatmul.mubr.f32.gmra.mrb[0].mxu0 %v1858
    %v1860 = vpop.f32.mrb[0].mxu0
    %v1861 = vadd.f32 %v43, %v1860
    %v1862 = vpop.f32.mrb[0].mxu0
    %1863 = vdwg.mxu0
    %1864 = vmatprep.subr.mxu0 0.0
    %v1865 = vand.u32 %v22, 4294901760
    %v1866 = vsub.f32 %v22, %v1865
    %v1867 = vand.u32 %v1866, 4294901760
    %v1868 = vsub.f32 %v1866, %v1867
    %v1869 = vand.u32 %v1868, 4294901760
    %1870 = vmatpush1.msra.mxu0 %v1869
    %1871 = vmatprep.subr.mxu0 0.0
    %v1872 = vand.u32 %v1745, 4294901760
    %v1873 = vsub.f32 %v1745, %v1872
    %v1874 = vand.u32 %v1873, 4294901760
    %v1875 = vsub.f32 %v1873, %v1874
    %v1876 = vand.u32 %v1875, 4294901760
    %1877 = vmatpush1.msra.mxu0 %v1876
    %1878 = vmatprep.subr.mxu0 0.0
    %1879 = vmatpush1.msra.mxu0 0.0
    %1880 = vmatprep.subr.mxu0 0.0
    %1881 = vmatpush1.msra.mxu0 0.0
    %1882 = vmatprep.subr.mxu0 0.0
    %1883 = vmatpush1.msra.mxu0 0.0
    %1884 = vmatprep.subr.mxu0 0.0
    %1885 = vmatpush1.msra.mxu0 0.0
    %1886 = vmatprep.subr.mxu0 0.0
    %1887 = vmatpush1.msra.mxu0 0.0
    %1888 = vmatprep.subr.mxu0 0.0
    %1889 = vmatpush1.msra.mxu0 0.0
    %1890 = vmatprep.subr.mxu0 0.0
    %1891 = vmatpush1.msra.mxu0 0.0
    %1892 = vmatprep.subr.mxu0 0.0
    %1893 = vmatpush1.msra.mxu0 0.0
    %1894 = vmatprep.subr.mxu0 0.0
    %1895 = vmatpush1.msra.mxu0 0.0
    %1896 = vmatprep.subr.mxu0 0.0
    %1897 = vmatpush1.msra.mxu0 0.0
    %1898 = vmatprep.subr.mxu0 0.0
    %1899 = vmatpush1.msra.mxu0 0.0
    %1900 = vmatprep.subr.mxu0 0.0
    %1901 = vmatpush1.msra.mxu0 0.0
    %1902 = vmatprep.subr.mxu0 0.0
    %1903 = vmatpush1.msra.mxu0 0.0
    %1904 = vmatprep.subr.mxu0 0.0
    %1905 = vmatpush1.msra.mxu0 0.0
    %1906 = vmatprep.subr.mxu0 0.0
    %1907 = vmatpush1.msra.mxu0 0.0
    %1908 = vmatprep.subr.mxu0 0.0
    %1909 = vmatpush1.msra.mxu0 0.0
    %1910 = vmatprep.subr.mxu0 0.0
    %1911 = vmatpush1.msra.mxu0 0.0
    %1912 = vmatprep.subr.mxu0 0.0
    %1913 = vmatpush1.msra.mxu0 0.0
    %1914 = vmatprep.subr.mxu0 0.0
    %1915 = vmatpush1.msra.mxu0 0.0
    %1916 = vmatprep.subr.mxu0 0.0
    %1917 = vmatpush1.msra.mxu0 0.0
    %1918 = vmatprep.subr.mxu0 0.0
    %1919 = vmatpush1.msra.mxu0 0.0
    %1920 = vmatprep.subr.mxu0 0.0
    %1921 = vmatpush1.msra.mxu0 0.0
    %1922 = vmatprep.subr.mxu0 0.0
    %1923 = vmatpush1.msra.mxu0 0.0
    %1924 = vmatprep.subr.mxu0 0.0
    %1925 = vmatpush1.msra.mxu0 0.0
    %1926 = vmatprep.subr.mxu0 0.0
    %1927 = vmatpush1.msra.mxu0 0.0
    %1928 = vmatprep.subr.mxu0 0.0
    %1929 = vmatpush1.msra.mxu0 0.0
    %1930 = vmatprep.subr.mxu0 0.0
    %1931 = vmatpush1.msra.mxu0 0.0
    %1932 = vmatprep.subr.mxu0 0.0
    %1933 = vmatpush1.msra.mxu0 0.0
    %1934 = vmatprep.subr.mxu0 0.0
    %1935 = vmatpush1.msra.mxu0 0.0
    %1936 = vmatprep.subr.mxu0 0.0
    %1937 = vmatpush1.msra.mxu0 0.0
    %1938 = vmatprep.mubr.f32.mxu0 0.0
    %v1939 = vand.u32 %v1734, 4294901760
    %1940 = vmatmul.mubr.f32.gmra.mrb[0].mxu0 %v1939
    %v1941 = vpop.f32.mrb[0].mxu0
    %v1942 = vadd.f32 %v1821, %v1941
    %v1943 = vpop.f32.mrb[0].mxu0
    %1944 = vmatprep.mubr.f32.mxu0 0.0
    %v1945 = vand.u32 %v1736, 4294901760
    %1946 = vmatmul.mubr.f32.gmra.mrb[0].mxu0 %v1945
    %v1947 = vpop.f32.mrb[0].mxu0
    %v1948 = vadd.f32 %v1831, %v1947
    %v1949 = vpop.f32.mrb[0].mxu0
    %1950 = vmatprep.mubr.f32.mxu0 0.0
    %v1951 = vand.u32 %v1738, 4294901760
    %1952 = vmatmul.mubr.f32.gmra.mrb[0].mxu0 %v1951
    %v1953 = vpop.f32.mrb[0].mxu0
    %v1954 = vadd.f32 %v1841, %v1953
    %v1955 = vpop.f32.mrb[0].mxu0
    %1956 = vmatprep.mubr.f32.mxu0 0.0
    %v1957 = vand.u32 %v1740, 4294901760
    %1958 = vmatmul.mubr.f32.gmra.mrb[0].mxu0 %v1957
    %v1959 = vpop.f32.mrb[0].mxu0
    %v1960 = vadd.f32 %v1851, %v1959
    %v1961 = vpop.f32.mrb[0].mxu0
    %1962 = vmatprep.mubr.f32.mxu0 0.0
    %v1963 = vand.u32 %v1742, 4294901760
    %1964 = vmatmul.mubr.f32.gmra.mrb[0].mxu0 %v1963
    %v1965 = vpop.f32.mrb[0].mxu0
    %v1966 = vadd.f32 %v1861, %v1965
    %v1967 = vpop.f32.mrb[0].mxu0
    %1968 = vdwg.mxu0
    %1969 = vmatprep.subr.mxu0 0.0
    %v1970 = vand.u32 %v22, 4294901760
    %v1971 = vsub.f32 %v22, %v1970
    %1972 = vmatpush1.msra.mxu0 %v1971
    %1973 = vmatprep.subr.mxu0 0.0
    %v1974 = vand.u32 %v1745, 4294901760
    %v1975 = vsub.f32 %v1745, %v1974
    %1976 = vmatpush1.msra.mxu0 %v1975
    %1977 = vmatprep.subr.mxu0 0.0
    %1978 = vmatpush1.msra.mxu0 0.0
    %1979 = vmatprep.subr.mxu0 0.0
    %1980 = vmatpush1.msra.mxu0 0.0
    %1981 = vmatprep.subr.mxu0 0.0
    %1982 = vmatpush1.msra.mxu0 0.0
    %1983 = vmatprep.subr.mxu0 0.0
    %1984 = vmatpush1.msra.mxu0 0.0
    %1985 = vmatprep.subr.mxu0 0.0
    %1986 = vmatpush1.msra.mxu0 0.0
    %1987 = vmatprep.subr.mxu0 0.0
    %1988 = vmatpush1.msra.mxu0 0.0
    %1989 = vmatprep.subr.mxu0 0.0
    %1990 = vmatpush1.msra.mxu0 0.0
    %1991 = vmatprep.subr.mxu0 0.0
    %1992 = vmatpush1.msra.mxu0 0.0
    %1993 = vmatprep.subr.mxu0 0.0
    %1994 = vmatpush1.msra.mxu0 0.0
    %1995 = vmatprep.subr.mxu0 0.0
    %1996 = vmatpush1.msra.mxu0 0.0
    %1997 = vmatprep.subr.mxu0 0.0
    %1998 = vmatpush1.msra.mxu0 0.0
    %1999 = vmatprep.subr.mxu0 0.0
    %2000 = vmatpush1.msra.mxu0 0.0
    %2001 = vmatprep.subr.mxu0 0.0
    %2002 = vmatpush1.msra.mxu0 0.0
    %2003 = vmatprep.subr.mxu0 0.0
    %2004 = vmatpush1.msra.mxu0 0.0
    %2005 = vmatprep.subr.mxu0 0.0
    %2006 = vmatpush1.msra.mxu0 0.0
    %2007 = vmatprep.subr.mxu0 0.0
    %2008 = vmatpush1.msra.mxu0 0.0
    %2009 = vmatprep.subr.mxu0 0.0
    %2010 = vmatpush1.msra.mxu0 0.0
    %2011 = vmatprep.subr.mxu0 0.0
    %2012 = vmatpush1.msra.mxu0 0.0
    %2013 = vmatprep.subr.mxu0 0.0
    %2014 = vmatpush1.msra.mxu0 0.0
    %2015 = vmatprep.subr.mxu0 0.0
    %2016 = vmatpush1.msra.mxu0 0.0
    %2017 = vmatprep.subr.mxu0 0.0
    %2018 = vmatpush1.msra.mxu0 0.0
    %2019 = vmatprep.subr.mxu0 0.0
    %2020 = vmatpush1.msra.mxu0 0.0
    %2021 = vmatprep.subr.mxu0 0.0
    %2022 = vmatpush1.msra.mxu0 0.0
    %2023 = vmatprep.subr.mxu0 0.0
    %2024 = vmatpush1.msra.mxu0 0.0
    %2025 = vmatprep.subr.mxu0 0.0
    %2026 = vmatpush1.msra.mxu0 0.0
    %2027 = vmatprep.subr.mxu0 0.0
    %2028 = vmatpush1.msra.mxu0 0.0
    %2029 = vmatprep.subr.mxu0 0.0
    %2030 = vmatpush1.msra.mxu0 0.0
    %2031 = vmatprep.subr.mxu0 0.0
    %2032 = vmatpush1.msra.mxu0 0.0
    %2033 = vmatprep.subr.mxu0 0.0
    %2034 = vmatpush1.msra.mxu0 0.0
    %2035 = vmatprep.subr.mxu0 0.0
    %2036 = vmatpush1.msra.mxu0 0.0
    %2037 = vmatprep.mubr.f32.mxu0 0.0
    %v2038 = vand.u32 %v1734, 4294901760
    %v2039 = vsub.f32 %v1734, %v2038
    %2040 = vmatmul.mubr.f32.gmra.mrb[0].mxu0 %v2039
    %v2041 = vpop.f32.mrb[0].mxu0
    %v2042 = vadd.f32 %v1942, %v2041
    %v2043 = vpop.f32.mrb[0].mxu0
    %2044 = vmatprep.mubr.f32.mxu0 0.0
    %v2045 = vand.u32 %v1736, 4294901760
    %v2046 = vsub.f32 %v1736, %v2045
    %2047 = vmatmul.mubr.f32.gmra.mrb[0].mxu0 %v2046
    %v2048 = vpop.f32.mrb[0].mxu0
    %v2049 = vadd.f32 %v1948, %v2048
    %v2050 = vpop.f32.mrb[0].mxu0
    %2051 = vmatprep.mubr.f32.mxu0 0.0
    %v2052 = vand.u32 %v1738, 4294901760
    %v2053 = vsub.f32 %v1738, %v2052
    %2054 = vmatmul.mubr.f32.gmra.mrb[0].mxu0 %v2053
    %v2055 = vpop.f32.mrb[0].mxu0
    %v2056 = vadd.f32 %v1954, %v2055
    %v2057 = vpop.f32.mrb[0].mxu0
    %2058 = vmatprep.mubr.f32.mxu0 0.0
    %v2059 = vand.u32 %v1740, 4294901760
    %v2060 = vsub.f32 %v1740, %v2059
    %2061 = vmatmul.mubr.f32.gmra.mrb[0].mxu0 %v2060
    %v2062 = vpop.f32.mrb[0].mxu0
    %v2063 = vadd.f32 %v1960, %v2062
    %v2064 = vpop.f32.mrb[0].mxu0
    %2065 = vmatprep.mubr.f32.mxu0 0.0
    %v2066 = vand.u32 %v1742, 4294901760
    %v2067 = vsub.f32 %v1742, %v2066
    %2068 = vmatmul.mubr.f32.gmra.mrb[0].mxu0 %v2067
    %v2069 = vpop.f32.mrb[0].mxu0
    %v2070 = vadd.f32 %v1966, %v2069
    %v2071 = vpop.f32.mrb[0].mxu0
    %2072 = vdwg.mxu0
    %2073 = vmatprep.subr.mxu0 0.0
    %v2074 = vand.u32 %v22, 4294901760
    %2075 = vmatpush1.msra.mxu0 %v2074
    %2076 = vmatprep.subr.mxu0 0.0
    %v2077 = vand.u32 %v1745, 4294901760
    %2078 = vmatpush1.msra.mxu0 %v2077
    %2079 = vmatprep.subr.mxu0 0.0
    %2080 = vmatpush1.msra.mxu0 0.0
    %2081 = vmatprep.subr.mxu0 0.0
    %2082 = vmatpush1.msra.mxu0 0.0
    %2083 = vmatprep.subr.mxu0 0.0
    %2084 = vmatpush1.msra.mxu0 0.0
    %2085 = vmatprep.subr.mxu0 0.0
    %2086 = vmatpush1.msra.mxu0 0.0
    %2087 = vmatprep.subr.mxu0 0.0
    %2088 = vmatpush1.msra.mxu0 0.0
    %2089 = vmatprep.subr.mxu0 0.0
    %2090 = vmatpush1.msra.mxu0 0.0
    %2091 = vmatprep.subr.mxu0 0.0
    %2092 = vmatpush1.msra.mxu0 0.0
    %2093 = vmatprep.subr.mxu0 0.0
    %2094 = vmatpush1.msra.mxu0 0.0
    %2095 = vmatprep.subr.mxu0 0.0
    %2096 = vmatpush1.msra.mxu0 0.0
    %2097 = vmatprep.subr.mxu0 0.0
    %2098 = vmatpush1.msra.mxu0 0.0
    %2099 = vmatprep.subr.mxu0 0.0
    %2100 = vmatpush1.msra.mxu0 0.0
    %2101 = vmatprep.subr.mxu0 0.0
    %2102 = vmatpush1.msra.mxu0 0.0
    %2103 = vmatprep.subr.mxu0 0.0
    %2104 = vmatpush1.msra.mxu0 0.0
    %2105 = vmatprep.subr.mxu0 0.0
    %2106 = vmatpush1.msra.mxu0 0.0
    %2107 = vmatprep.subr.mxu0 0.0
    %2108 = vmatpush1.msra.mxu0 0.0
    %2109 = vmatprep.subr.mxu0 0.0
    %2110 = vmatpush1.msra.mxu0 0.0
    %2111 = vmatprep.subr.mxu0 0.0
    %2112 = vmatpush1.msra.mxu0 0.0
    %2113 = vmatprep.subr.mxu0 0.0
    %2114 = vmatpush1.msra.mxu0 0.0
    %2115 = vmatprep.subr.mxu0 0.0
    %2116 = vmatpush1.msra.mxu0 0.0
    %2117 = vmatprep.subr.mxu0 0.0
    %2118 = vmatpush1.msra.mxu0 0.0
    %2119 = vmatprep.subr.mxu0 0.0
    %2120 = vmatpush1.msra.mxu0 0.0
    %2121 = vmatprep.subr.mxu0 0.0
    %2122 = vmatpush1.msra.mxu0 0.0
    %2123 = vmatprep.subr.mxu0 0.0
    %2124 = vmatpush1.msra.mxu0 0.0
    %2125 = vmatprep.subr.mxu0 0.0
    %2126 = vmatpush1.msra.mxu0 0.0
    %2127 = vmatprep.subr.mxu0 0.0
    %2128 = vmatpush1.msra.mxu0 0.0
    %2129 = vmatprep.subr.mxu0 0.0
    %2130 = vmatpush1.msra.mxu0 0.0
    %2131 = vmatprep.subr.mxu0 0.0
    %2132 = vmatpush1.msra.mxu0 0.0
    %2133 = vmatprep.subr.mxu0 0.0
    %2134 = vmatpush1.msra.mxu0 0.0
    %2135 = vmatprep.subr.mxu0 0.0
    %2136 = vmatpush1.msra.mxu0 0.0
    %2137 = vmatprep.subr.mxu0 0.0
    %2138 = vmatpush1.msra.mxu0 0.0
    %2139 = vmatprep.mubr.f32.mxu0 0.0
    %v2140 = vand.u32 %v1734, 4294901760
    %v2141 = vsub.f32 %v1734, %v2140
    %v2142 = vand.u32 %v2141, 4294901760
    %2143 = vmatmul.mubr.f32.gmra.mrb[0].mxu0 %v2142
    %v2144 = vpop.f32.mrb[0].mxu0
    %v2145 = vadd.f32 %v2042, %v2144
    %v2146 = vpop.f32.mrb[0].mxu0
    %2147 = vmatprep.mubr.f32.mxu0 0.0
    %v2148 = vand.u32 %v1736, 4294901760
    %v2149 = vsub.f32 %v1736, %v2148
    %v2150 = vand.u32 %v2149, 4294901760
    %2151 = vmatmul.mubr.f32.gmra.mrb[0].mxu0 %v2150
    %v2152 = vpop.f32.mrb[0].mxu0
    %v2153 = vadd.f32 %v2049, %v2152
    %v2154 = vpop.f32.mrb[0].mxu0
    %2155 = vmatprep.mubr.f32.mxu0 0.0
    %v2156 = vand.u32 %v1738, 4294901760
    %v2157 = vsub.f32 %v1738, %v2156
    %v2158 = vand.u32 %v2157, 4294901760
    %2159 = vmatmul.mubr.f32.gmra.mrb[0].mxu0 %v2158
    %v2160 = vpop.f32.mrb[0].mxu0
    %v2161 = vadd.f32 %v2056, %v2160
    %v2162 = vpop.f32.mrb[0].mxu0
    %2163 = vmatprep.mubr.f32.mxu0 0.0
    %v2164 = vand.u32 %v1740, 4294901760
    %v2165 = vsub.f32 %v1740, %v2164
    %v2166 = vand.u32 %v2165, 4294901760
    %2167 = vmatmul.mubr.f32.gmra.mrb[0].mxu0 %v2166
    %v2168 = vpop.f32.mrb[0].mxu0
    %v2169 = vadd.f32 %v2063, %v2168
    %v2170 = vpop.f32.mrb[0].mxu0
    %2171 = vmatprep.mubr.f32.mxu0 0.0
    %v2172 = vand.u32 %v1742, 4294901760
    %v2173 = vsub.f32 %v1742, %v2172
    %v2174 = vand.u32 %v2173, 4294901760
    %2175 = vmatmul.mubr.f32.gmra.mrb[0].mxu0 %v2174
    %v2176 = vpop.f32.mrb[0].mxu0
    %v2177 = vadd.f32 %v2070, %v2176
    %v2178 = vpop.f32.mrb[0].mxu0
    %2179 = vdwg.mxu0
    %2180 = vmatprep.subr.mxu0 0.0
    %v2181 = vand.u32 %v22, 4294901760
    %v2182 = vsub.f32 %v22, %v2181
    %v2183 = vand.u32 %v2182, 4294901760
    %2184 = vmatpush1.msra.mxu0 %v2183
    %2185 = vmatprep.subr.mxu0 0.0
    %v2186 = vand.u32 %v1745, 4294901760
    %v2187 = vsub.f32 %v1745, %v2186
    %v2188 = vand.u32 %v2187, 4294901760
    %2189 = vmatpush1.msra.mxu0 %v2188
    %2190 = vmatprep.subr.mxu0 0.0
    %2191 = vmatpush1.msra.mxu0 0.0
    %2192 = vmatprep.subr.mxu0 0.0
    %2193 = vmatpush1.msra.mxu0 0.0
    %2194 = vmatprep.subr.mxu0 0.0
    %2195 = vmatpush1.msra.mxu0 0.0
    %2196 = vmatprep.subr.mxu0 0.0
    %2197 = vmatpush1.msra.mxu0 0.0
    %2198 = vmatprep.subr.mxu0 0.0
    %2199 = vmatpush1.msra.mxu0 0.0
    %2200 = vmatprep.subr.mxu0 0.0
    %2201 = vmatpush1.msra.mxu0 0.0
    %2202 = vmatprep.subr.mxu0 0.0
    %2203 = vmatpush1.msra.mxu0 0.0
    %2204 = vmatprep.subr.mxu0 0.0
    %2205 = vmatpush1.msra.mxu0 0.0
    %2206 = vmatprep.subr.mxu0 0.0
    %2207 = vmatpush1.msra.mxu0 0.0
    %2208 = vmatprep.subr.mxu0 0.0
    %2209 = vmatpush1.msra.mxu0 0.0
    %2210 = vmatprep.subr.mxu0 0.0
    %2211 = vmatpush1.msra.mxu0 0.0
    %2212 = vmatprep.subr.mxu0 0.0
    %2213 = vmatpush1.msra.mxu0 0.0
    %2214 = vmatprep.subr.mxu0 0.0
    %2215 = vmatpush1.msra.mxu0 0.0
    %2216 = vmatprep.subr.mxu0 0.0
    %2217 = vmatpush1.msra.mxu0 0.0
    %2218 = vmatprep.subr.mxu0 0.0
    %2219 = vmatpush1.msra.mxu0 0.0
    %2220 = vmatprep.subr.mxu0 0.0
    %2221 = vmatpush1.msra.mxu0 0.0
    %2222 = vmatprep.subr.mxu0 0.0
    %2223 = vmatpush1.msra.mxu0 0.0
    %2224 = vmatprep.subr.mxu0 0.0
    %2225 = vmatpush1.msra.mxu0 0.0
    %2226 = vmatprep.subr.mxu0 0.0
    %2227 = vmatpush1.msra.mxu0 0.0
    %2228 = vmatprep.subr.mxu0 0.0
    %2229 = vmatpush1.msra.mxu0 0.0
    %2230 = vmatprep.subr.mxu0 0.0
    %2231 = vmatpush1.msra.mxu0 0.0
    %2232 = vmatprep.subr.mxu0 0.0
    %2233 = vmatpush1.msra.mxu0 0.0
    %2234 = vmatprep.subr.mxu0 0.0
    %2235 = vmatpush1.msra.mxu0 0.0
    %2236 = vmatprep.subr.mxu0 0.0
    %2237 = vmatpush1.msra.mxu0 0.0
    %2238 = vmatprep.subr.mxu0 0.0
    %2239 = vmatpush1.msra.mxu0 0.0
    %2240 = vmatprep.subr.mxu0 0.0
    %2241 = vmatpush1.msra.mxu0 0.0
    %2242 = vmatprep.subr.mxu0 0.0
    %2243 = vmatpush1.msra.mxu0 0.0
    %2244 = vmatprep.subr.mxu0 0.0
    %2245 = vmatpush1.msra.mxu0 0.0
    %2246 = vmatprep.subr.mxu0 0.0
    %2247 = vmatpush1.msra.mxu0 0.0
    %2248 = vmatprep.subr.mxu0 0.0
    %2249 = vmatpush1.msra.mxu0 0.0
    %2250 = vmatprep.mubr.f32.mxu0 0.0
    %v2251 = vand.u32 %v1734, 4294901760
    %2252 = vmatmul.mubr.f32.gmra.mrb[0].mxu0 %v2251
    %v2253 = vpop.f32.mrb[0].mxu0
    %v2254 = vadd.f32 %v2145, %v2253
    %v2255 = vpop.f32.mrb[0].mxu0
    %2256 = vmatprep.mubr.f32.mxu0 0.0
    %v2257 = vand.u32 %v1736, 4294901760
    %2258 = vmatmul.mubr.f32.gmra.mrb[0].mxu0 %v2257
    %v2259 = vpop.f32.mrb[0].mxu0
    %v2260 = vadd.f32 %v2153, %v2259
    %v2261 = vpop.f32.mrb[0].mxu0
    %2262 = vmatprep.mubr.f32.mxu0 0.0
    %v2263 = vand.u32 %v1738, 4294901760
    %2264 = vmatmul.mubr.f32.gmra.mrb[0].mxu0 %v2263
    %v2265 = vpop.f32.mrb[0].mxu0
    %v2266 = vadd.f32 %v2161, %v2265
    %v2267 = vpop.f32.mrb[0].mxu0
    %2268 = vmatprep.mubr.f32.mxu0 0.0
    %v2269 = vand.u32 %v1740, 4294901760
    %2270 = vmatmul.mubr.f32.gmra.mrb[0].mxu0 %v2269
    %v2271 = vpop.f32.mrb[0].mxu0
    %v2272 = vadd.f32 %v2169, %v2271
    %v2273 = vpop.f32.mrb[0].mxu0
    %2274 = vmatprep.mubr.f32.mxu0 0.0
    %v2275 = vand.u32 %v1742, 4294901760
    %2276 = vmatmul.mubr.f32.gmra.mrb[0].mxu0 %v2275
    %v2277 = vpop.f32.mrb[0].mxu0
    %v2278 = vadd.f32 %v2177, %v2277
    %v2279 = vpop.f32.mrb[0].mxu0
    %2280 = vdwg.mxu0
    %2281 = vmatprep.subr.mxu0 0.0
    %v2282 = vand.u32 %v22, 4294901760
    %2283 = vmatpush1.msra.mxu0 %v2282
    %2284 = vmatprep.subr.mxu0 0.0
    %v2285 = vand.u32 %v1745, 4294901760
    %2286 = vmatpush1.msra.mxu0 %v2285
    %2287 = vmatprep.subr.mxu0 0.0
    %2288 = vmatpush1.msra.mxu0 0.0
    %2289 = vmatprep.subr.mxu0 0.0
    %2290 = vmatpush1.msra.mxu0 0.0
    %2291 = vmatprep.subr.mxu0 0.0
    %2292 = vmatpush1.msra.mxu0 0.0
    %2293 = vmatprep.subr.mxu0 0.0
    %2294 = vmatpush1.msra.mxu0 0.0
    %2295 = vmatprep.subr.mxu0 0.0
    %2296 = vmatpush1.msra.mxu0 0.0
    %2297 = vmatprep.subr.mxu0 0.0
    %2298 = vmatpush1.msra.mxu0 0.0
    %2299 = vmatprep.subr.mxu0 0.0
    %2300 = vmatpush1.msra.mxu0 0.0
    %2301 = vmatprep.subr.mxu0 0.0
    %2302 = vmatpush1.msra.mxu0 0.0
    %2303 = vmatprep.subr.mxu0 0.0
    %2304 = vmatpush1.msra.mxu0 0.0
    %2305 = vmatprep.subr.mxu0 0.0
    %2306 = vmatpush1.msra.mxu0 0.0
    %2307 = vmatprep.subr.mxu0 0.0
    %2308 = vmatpush1.msra.mxu0 0.0
    %2309 = vmatprep.subr.mxu0 0.0
    %2310 = vmatpush1.msra.mxu0 0.0
    %2311 = vmatprep.subr.mxu0 0.0
    %2312 = vmatpush1.msra.mxu0 0.0
    %2313 = vmatprep.subr.mxu0 0.0
    %2314 = vmatpush1.msra.mxu0 0.0
    %2315 = vmatprep.subr.mxu0 0.0
    %2316 = vmatpush1.msra.mxu0 0.0
    %2317 = vmatprep.subr.mxu0 0.0
    %2318 = vmatpush1.msra.mxu0 0.0
    %2319 = vmatprep.subr.mxu0 0.0
    %2320 = vmatpush1.msra.mxu0 0.0
    %2321 = vmatprep.subr.mxu0 0.0
    %2322 = vmatpush1.msra.mxu0 0.0
    %2323 = vmatprep.subr.mxu0 0.0
    %2324 = vmatpush1.msra.mxu0 0.0
    %2325 = vmatprep.subr.mxu0 0.0
    %2326 = vmatpush1.msra.mxu0 0.0
    %2327 = vmatprep.subr.mxu0 0.0
    %2328 = vmatpush1.msra.mxu0 0.0
    %2329 = vmatprep.subr.mxu0 0.0
    %2330 = vmatpush1.msra.mxu0 0.0
    %2331 = vmatprep.subr.mxu0 0.0
    %2332 = vmatpush1.msra.mxu0 0.0
    %2333 = vmatprep.subr.mxu0 0.0
    %2334 = vmatpush1.msra.mxu0 0.0
    %2335 = vmatprep.subr.mxu0 0.0
    %2336 = vmatpush1.msra.mxu0 0.0
    %2337 = vmatprep.subr.mxu0 0.0
    %2338 = vmatpush1.msra.mxu0 0.0
    %2339 = vmatprep.subr.mxu0 0.0
    %2340 = vmatpush1.msra.mxu0 0.0
    %2341 = vmatprep.subr.mxu0 0.0
    %2342 = vmatpush1.msra.mxu0 0.0
    %2343 = vmatprep.subr.mxu0 0.0
    %2344 = vmatpush1.msra.mxu0 0.0
    %2345 = vmatprep.subr.mxu0 0.0
    %2346 = vmatpush1.msra.mxu0 0.0
    %2347 = vmatprep.mubr.f32.mxu0 0.0
    %v2348 = vand.u32 %v1734, 4294901760
    %2349 = vmatmul.mubr.f32.gmra.mrb[0].mxu0 %v2348
    %v2350 = vpop.f32.mrb[0].mxu0
    %v2351 = vadd.f32 %v2254, %v2350
    %v2352 = vpop.f32.mrb[0].mxu0
    %2353 = vmatprep.mubr.f32.mxu0 0.0
    %v2354 = vand.u32 %v1736, 4294901760
    %2355 = vmatmul.mubr.f32.gmra.mrb[0].mxu0 %v2354
    %v2356 = vpop.f32.mrb[0].mxu0
    %v2357 = vadd.f32 %v2260, %v2356
    %v2358 = vpop.f32.mrb[0].mxu0
    %2359 = vmatprep.mubr.f32.mxu0 0.0
    %v2360 = vand.u32 %v1738, 4294901760
    %2361 = vmatmul.mubr.f32.gmra.mrb[0].mxu0 %v2360
    %v2362 = vpop.f32.mrb[0].mxu0
    %v2363 = vadd.f32 %v2266, %v2362
    %v2364 = vpop.f32.mrb[0].mxu0
    %2365 = vmatprep.mubr.f32.mxu0 0.0
    %v2366 = vand.u32 %v1740, 4294901760
    %2367 = vmatmul.mubr.f32.gmra.mrb[0].mxu0 %v2366
    %v2368 = vpop.f32.mrb[0].mxu0
    %v2369 = vadd.f32 %v2272, %v2368
    %v2370 = vpop.f32.mrb[0].mxu0
    %2371 = vmatprep.mubr.f32.mxu0 0.0
    %v2372 = vand.u32 %v1742, 4294901760
    %2373 = vmatmul.mubr.f32.gmra.mrb[0].mxu0 %v2372
    %v2374 = vpop.f32.mrb[0].mxu0
    %v2375 = vadd.f32 %v2278, %v2374
    %v2376 = vpop.f32.mrb[0].mxu0
    %2377 = vdwg.mxu0
    %2378 = vst.msk [vmem:[%s3] sm:$0xff] %vm49, %v2351
    %2379 = vst.msk [vmem:[%s3 + $0x8] sm:$0xff] %vm49, %v2357
    %2380 = vst.msk [vmem:[%s3 + $0x10] sm:$0xff] %vm49, %v2363
    %2381 = vst.msk [vmem:[%s3 + $0x18] sm:$0xff] %vm49, %v2369
    %2382 = vst.msk [vmem:[%s3 + $0x20] sm:$0xff] %vm49, %v2375
    // Predicated region
    $region14: #{tpu_custom_call.1} parent=1 // pred_check
      _
    $region15: #{tpu_custom_call.1} parent=1 // pred_check_branch
      %2384 = sbr.rel (0) target = $region17
    $region16: #{tpu_custom_call.1} parent=1 // pred_region
      _
    $region17: #{tpu_custom_call.1} parent=1 // pred_fallthru
      _
    // Predicated region
    $region18: #{tpu_custom_call.1} parent=1 // pred_check
      _
    $region19: #{tpu_custom_call.1} parent=1 // pred_check_branch
      %2386 = sbr.rel (0) target = $region21
    $region20: #{tpu_custom_call.1} parent=1 // pred_region
      %s2388 = ssub.s32 32, 32
      %2389 = vsyncadd [#allocation3], %s2388
      %s2391 = sshll.u32 [#allocation2], 4
      %s2392 = int_to_ptr.vmem [resolvable:$true] %s2391
      %2394 = dma.vmem_to_hbm [thread:$0]  %s2392, 32, %s4, [#allocation3]
    $region21: #{tpu_custom_call.1} parent=1 // pred_fallthru
      _
    // Predicated region
    $region22: #{tpu_custom_call.1} parent=1 // pred_check
      _
    $region23: #{tpu_custom_call.1} parent=1 // pred_check_branch
      %2396 = sbr.rel (0) target = $region25
    $region24: #{tpu_custom_call.1} parent=1 // pred_region
      _
    $region25: #{tpu_custom_call.1} parent=1 // pred_fallthru
      _
    // Predicated region
    $region26: #{tpu_custom_call.1} parent=1 // pred_check
      _
    $region27: #{tpu_custom_call.1} parent=1 // pred_check_branch
      %2398 = sbr.rel (0) target = $region29
    $region28: #{tpu_custom_call.1} parent=1 // pred_region
      %2399 = dma.done [#allocation3], 32
    $region29: #{tpu_custom_call.1} parent=1 // pred_fallthru
      _
    %2400 = vsyncpa [#allocation3], 1

</llo_original>
